<compile_context>
chip_gen: v5e
topology: v5e:2x2
jax: 0.10.0
libtpu: 0.0.40
codegen_flags: <defaults>
</compile_context>

<pallas_src>
import functools
from enum import Enum

import numpy as np
import jax
import jax.numpy as jnp
from jax import lax
from jax.experimental import pallas as pl
from jax.experimental.pallas import tpu as pltpu


class TNormType(Enum):
    Min = 0
    Product = 1


def _round_up(x, m):
    return ((x + m - 1) // m) * m


# ----------------------------------------------------------------------------
# Parameter construction (deterministic replica of FuzzyRules.__init__ with
# clustering=True): first n_memberships rules are [i]*n_inputs, then random
# rules deduplicated until n_memberships + n_random_rules unique rules exist.
# ----------------------------------------------------------------------------
def build_rule_masks(n_memberships, n_inputs, n_random_rules, seed=0):
    rng = np.random.RandomState(seed)
    masks = [[i] * n_inputs for i in range(n_memberships)]
    while len(masks) < n_memberships + n_random_rules:
        # randint(0, n_memberships - 1) faithfully replicates the original
        # PyTorch code (random rules never pick the last membership).
        random_rule = rng.randint(0, n_memberships - 1, n_inputs).tolist()
        masks.append(random_rule)
        masks = [list(x) for x in set(tuple(x) for x in masks)]
    return np.asarray(masks, dtype=np.int32)          # (n_rules, n_inputs)


def build_prod_selector(rule_masks_int, n_memberships, r_pad):
    """(M*N, R_pad) f32 one-hot: sel[m*N + n, r] = 1.0 iff rule_masks[r, n] == m.

    Rule columns r >= n_rules (lane padding to a multiple of 128) are zero.
    """
    n_rules, n_inputs = rule_masks_int.shape
    sel = np.zeros((n_memberships, n_inputs, r_pad), dtype=np.float32)
    for r in range(n_rules):
        for n in range(n_inputs):
            sel[rule_masks_int[r, n], n, r] = 1.0
    return sel.reshape(n_memberships * n_inputs, r_pad)


def build_min_selector(rule_masks_int, n_memberships, r_pad):
    """(M*N, N*R_pad) block-diagonal one-hot selector for the Min path:
       sel[m*N + n, n*R_pad + r] = 1.0 iff rule_masks[r, n] == m.

    mem2d @ sel gives ant[:, n*R_pad + r] = mem[b, rule_masks[r, n], n], so the
    min over inputs is a min over the N lane-aligned R_pad-wide chunks.
    """
    n_rules, n_inputs = rule_masks_int.shape
    sel = np.zeros((n_memberships, n_inputs, n_inputs, r_pad), dtype=np.float32)
    for r in range(n_rules):
        for n in range(n_inputs):
            sel[rule_masks_int[r, n], n, n, r] = 1.0
    return sel.reshape(n_memberships * n_inputs, n_inputs * r_pad)


# ----------------------------------------------------------------------------
# Kernels
# ----------------------------------------------------------------------------
def _fuzzy_min_kernel(mem_ref, sel_ref, out_ref, *, n_inputs, r_pad):
    """Min t-norm via one-hot MXU gather.

    mem_ref : (tb, M*N)       flattened memberships (index = m * N + n)
    sel_ref : (M*N, N*R_pad)  block-diagonal one-hot selector (resident)
    out_ref : (tb, R_pad)     rule firings (lane-dense store)
    """
    mem = mem_ref[...].astype(jnp.float32)
    # HIGHEST precision: an exact 0/1 selector times an f32 value reconstructs
    # the value exactly (no bf16 truncation), so this gather is exact.
    ant = jnp.dot(mem, sel_ref[...],
                  preferred_element_type=jnp.float32,
                  precision=lax.Precision.HIGHEST)          # (tb, N*R_pad)
    # N-1 cheap VPU mins over static, 128-lane-aligned chunks (no relayout).
    res = ant[:, 0:r_pad]
    for n in range(1, n_inputs):
        res = jnp.minimum(res, ant[:, n * r_pad:(n + 1) * r_pad])
    out_ref[...] = res.astype(out_ref.dtype)


def _fuzzy_prod_kernel(mem_ref, sel_ref, out_ref):
    """Product t-norm via log-domain MXU matmul.

    mem_ref : (tb, M*N)     flattened memberships
    sel_ref : (M*N, R_pad)  one-hot selector (resident)
    out_ref : (tb, R_pad)
    """
    # Clamp in f32 (so bf16/fp16 inputs can't flush the tiny constant to 0):
    # exact-zero memberships give log(tiny) instead of -inf, which would
    # otherwise produce 0 * (-inf) = NaN inside the dot; the product still
    # underflows to ~0.
    mem = mem_ref[...].astype(jnp.float32)
    logm = jnp.log(jnp.maximum(mem, 1e-30))
    s = jnp.dot(logm, sel_ref[...],
                preferred_element_type=jnp.float32,
                precision=lax.Precision.HIGHEST)
    out_ref[...] = jnp.exp(s).astype(out_ref.dtype)


# ----------------------------------------------------------------------------
# Wrapper
# ----------------------------------------------------------------------------
def _pick_tb(b_pad, cap):
    """Largest multiple-of-8 divisor of b_pad that is <= cap and leaves at
    least 2 grid steps when b_pad > 8, so the 'parallel' batch axis can shard
    across both TensorCores on megacore parts (v7x).  Because tb divides
    b_pad exactly, no pad to a multiple of tb is ever needed."""
    cap = max(8, (cap // 8) * 8)
    best = 8
    d = 8
    lim = min(b_pad, cap)
    while d <= lim:
        if b_pad % d == 0 and (b_pad // d >= 2 or b_pad <= 8):
            best = d
        d += 8
    return best


def fuzzy_rules_forward(membership_matrices, sel_min, sel_prod, n_rules, t_norm):
    """membership_matrices: (B, M, N); sel_min: (M*N, N*R_pad); sel_prod: (M*N, R_pad)."""
    B, M, N = membership_matrices.shape
    r_pad = sel_prod.shape[1]
    mn = M * N

    # Batch tiling: tb divides B8, so no full-array pad to a multiple of tb;
    # only a <= 7-row pad when B itself is not a multiple of 8.
    B8 = _round_up(B, 8)
    if t_norm == TNormType.Min:
        # Keep the (tb, N*R_pad) matmul intermediate comfortably inside VMEM.
        cap = min(1024, max(8, (8 * 1024 * 1024) // (N * r_pad * 4)))
    else:
        cap = 1024
    tb = _pick_tb(B8, cap)

    mem2d = membership_matrices.reshape(B, mn)
    if B8 != B:
        # Pad with 1.0 (safe for both t-norms and for log); sliced off below.
        mem2d = jnp.pad(mem2d, ((0, B8 - B), (0, 0)), constant_values=1.0)

    grid = (B8 // tb,)
    compiler_params = pltpu.CompilerParams(
        dimension_semantics=("parallel",),            # shard batch over cores
        vmem_limit_bytes=48 * 1024 * 1024,            # > 32MiB default, < v7x phys
    )

    if t_norm == TNormType.Product:
        cost = pl.CostEstimate(
            flops=2 * B8 * mn * r_pad,
            transcendentals=B8 * (mn + r_pad),        # log + exp
            bytes_accessed=4 * (B8 * (mn + r_pad) + mn * r_pad),
        )
        out = pl.pallas_call(
            _fuzzy_prod_kernel,
            out_shape=jax.ShapeDtypeStruct((B8, r_pad), membership_matrices.dtype),
            grid=grid,
            in_specs=[
                pl.BlockSpec((tb, mn), lambda b: (b, 0)),
                pl.BlockSpec((mn, r_pad), lambda b: (0, 0)),       # resident
            ],
            out_specs=pl.BlockSpec((tb, r_pad), lambda b: (b, 0)),
            compiler_params=compiler_params,
            cost_estimate=cost,
        )(mem2d, sel_prod)
    else:  # TNormType.Min
        cost = pl.CostEstimate(
            flops=2 * B8 * mn * (N * r_pad) + B8 * (N - 1) * r_pad,
            transcendentals=0,
            bytes_accessed=4 * (B8 * (mn + r_pad) + mn * N * r_pad),
        )
        kern = functools.partial(_fuzzy_min_kernel, n_inputs=N, r_pad=r_pad)
        out = pl.pallas_call(
            kern,
            out_shape=jax.ShapeDtypeStruct((B8, r_pad), membership_matrices.dtype),
            grid=grid,
            in_specs=[
                pl.BlockSpec((tb, mn), lambda b: (b, 0)),
                pl.BlockSpec((mn, N * r_pad), lambda b: (0, 0)),   # resident
            ],
            out_specs=pl.BlockSpec((tb, r_pad), lambda b: (b, 0)),
            compiler_params=compiler_params,
            cost_estimate=cost,
        )(mem2d, sel_min)

    # Strip batch / rule padding (cheap XLA slice outside the kernel).
    return out[:B, :n_rules]


# ----------------------------------------------------------------------------
# Pure-JAX reference (mirrors the torch.gather + min/prod forward)
# ----------------------------------------------------------------------------
def ref_forward(membership_matrices, rule_masks_int, t_norm):
    B = membership_matrices.shape[0]
    idx = jnp.broadcast_to(jnp.asarray(rule_masks_int, dtype=jnp.int32)[None],
                           (B,) + rule_masks_int.shape)
    antecedents = jnp.take_along_axis(membership_matrices, idx, axis=1)
    if t_norm == TNormType.Min:
        return antecedents.min(axis=2)
    return antecedents.prod(axis=2)


if __name__ == "__main__":
    # Small shapes consistent with the module's forward.
    B = 2
    n_memberships = 4
    n_inputs = 8
    n_random_rules = 3

    rule_masks_int = build_rule_masks(n_memberships, n_inputs,
                                      n_random_rules, seed=0)
    n_rules = rule_masks_int.shape[0]                 # 7
    r_pad = _round_up(n_rules, 128)                   # 128 (lane-dense output)
    sel_prod = jnp.asarray(build_prod_selector(rule_masks_int, n_memberships, r_pad))
    sel_min = jnp.asarray(build_min_selector(rule_masks_int, n_memberships, r_pad))

    key = jax.random.PRNGKey(0)
    membership_matrices = jax.random.uniform(
        key, (B, n_memberships, n_inputs), dtype=jnp.float32)

    ok = True
    for t_norm in (TNormType.Min, TNormType.Product):
        out = fuzzy_rules_forward(membership_matrices, sel_min, sel_prod,
                                  n_rules, t_norm)
        out = jax.block_until_ready(out)
        ref = ref_forward(membership_matrices, rule_masks_int, t_norm)
        ok = ok and bool(jnp.allclose(out, ref, rtol=1e-4, atol=1e-6))

    print("KERNEL_OK" if ok else "KERNEL_MISMATCH")
</pallas_src>

<mosaic_0001>
module attributes {stable_mosaic.version = 11 : i64} {
  func.func @_fuzzy_min_kernel(%arg0: i32, %arg1: memref<8x32xf32, #tpu.memory_space<vmem>>, %arg2: memref<32x1024xf32, #tpu.memory_space<vmem>>, %arg3: memref<8x128xf32, #tpu.memory_space<vmem>>) attributes {dimension_semantics = [#tpu.dimension_semantics<parallel>], iteration_bounds = array<i64: 1>, scalar_prefetch = 0 : i64, scratch_operands = 0 : i64, tpu.core_type = #tpu.core_type<tc>, window_params = [{transform_indices = @transform_0, window_bounds = array<i64: 8, 32>}, {pipeline_mode = #tpu.pipeline_mode<synchronous>, transform_indices = @transform_1, window_bounds = array<i64: 32, 1024>}, {transform_indices = @transform_2, window_bounds = array<i64: 8, 128>}]} {
    %c0 = arith.constant 0 : index
    %c0_0 = arith.constant 0 : index
    %0 = vector.load %arg1[%c0, %c0_0] : memref<8x32xf32, #tpu.memory_space<vmem>>, vector<8x32xf32>
    %c0_1 = arith.constant 0 : index
    %c0_2 = arith.constant 0 : index
    %1 = vector.load %arg2[%c0_1, %c0_2] : memref<32x1024xf32, #tpu.memory_space<vmem>>, vector<32x1024xf32>
    %cst = arith.constant dense<0.000000e+00> : vector<8x1024xf32>
    %2 = tpu.matmul %0, %1, %cst {dimension_numbers = #tpu.dot_dimension_numbers<[1], [0], [0], [1], [0, 0, 1, 1], [], []>, precision = #tpu.contract_precision<fp32>} : vector<8x32xf32>, vector<32x1024xf32>, vector<8x1024xf32> -> vector<8x1024xf32>
    %3 = vector.extract_strided_slice %2 {offsets = [0, 0], sizes = [8, 128], strides = [1, 1]} : vector<8x1024xf32> to vector<8x128xf32>
    %4 = vector.extract_strided_slice %2 {offsets = [0, 128], sizes = [8, 128], strides = [1, 1]} : vector<8x1024xf32> to vector<8x128xf32>
    %5 = arith.minimumf %3, %4 : vector<8x128xf32>
    %6 = vector.extract_strided_slice %2 {offsets = [0, 256], sizes = [8, 128], strides = [1, 1]} : vector<8x1024xf32> to vector<8x128xf32>
    %7 = arith.minimumf %5, %6 : vector<8x128xf32>
    %8 = vector.extract_strided_slice %2 {offsets = [0, 384], sizes = [8, 128], strides = [1, 1]} : vector<8x1024xf32> to vector<8x128xf32>
    %9 = arith.minimumf %7, %8 : vector<8x128xf32>
    %10 = vector.extract_strided_slice %2 {offsets = [0, 512], sizes = [8, 128], strides = [1, 1]} : vector<8x1024xf32> to vector<8x128xf32>
    %11 = arith.minimumf %9, %10 : vector<8x128xf32>
    %12 = vector.extract_strided_slice %2 {offsets = [0, 640], sizes = [8, 128], strides = [1, 1]} : vector<8x1024xf32> to vector<8x128xf32>
    %13 = arith.minimumf %11, %12 : vector<8x128xf32>
    %14 = vector.extract_strided_slice %2 {offsets = [0, 768], sizes = [8, 128], strides = [1, 1]} : vector<8x1024xf32> to vector<8x128xf32>
    %15 = arith.minimumf %13, %14 : vector<8x128xf32>
    %16 = vector.extract_strided_slice %2 {offsets = [0, 896], sizes = [8, 128], strides = [1, 1]} : vector<8x1024xf32> to vector<8x128xf32>
    %17 = arith.minimumf %15, %16 : vector<8x128xf32>
    %c0_3 = arith.constant 0 : index
    %c0_4 = arith.constant 0 : index
    %18 = vector.load %arg3[%c0_3, %c0_4] : memref<8x128xf32, #tpu.memory_space<vmem>>, vector<8x128xf32>
    tpu.vector_store %arg3[%c0_3, %c0_4], %17 {strides = array<i32>} : memref<8x128xf32, #tpu.memory_space<vmem>>, vector<8x128xf32>,
    return
  }
  func.func @transform_0(%arg0: i32) -> (i32, i32) {
    %c0_i32 = arith.constant 0 : i32
    %c0_i32_0 = arith.constant 0 : i32
    return %arg0, %c0_i32 : i32, i32
  }
  func.func @transform_1(%arg0: i32) -> (i32, i32) {
    %c0_i32 = arith.constant 0 : i32
    %c0_i32_0 = arith.constant 0 : i32
    %c0_i32_1 = arith.constant 0 : i32
    return %c0_i32, %c0_i32_0 : i32, i32
  }
  func.func @transform_2(%arg0: i32) -> (i32, i32) {
    %c0_i32 = arith.constant 0 : i32
    %c0_i32_0 = arith.constant 0 : i32
    return %arg0, %c0_i32 : i32, i32
  }
}

</mosaic_0001>

<llo_original>
// kernel: tpu_custom_call.1
$region0: #{tpu_custom_call.1}
  #allocation0 [shape = 'u32[]', space=smem, size = 0x4, offset = 0x4, fixed_abs, tag = 'smem constant byte address 0x4 - core index']
  #allocation1 [shape = 'u32[72,128]{1,0:T(1,128)}', space=vmem, size = 0x9000, scoped, tag = 'internal scratch']
  %s0 = inlined_call_operand.hbm [shape: f32[8,32], index: 0, kind: input, shape index: {}]
  %s1 = inlined_call_operand.hbm [shape: f32[32,1024], index: 1, kind: input, shape index: {}]
  %s2 = inlined_call_operand.hbm [shape: f32[8,128], index: 2, kind: output, shape index: {}]
  %s3 = sld [smem:[#allocation0]]
  $region26: #{tpu_custom_call.1} parent=0
    _
  %s5 = ssub.s32 1, %s3
  %s6 = scalar_select 0, %s5, %s3
  $region1: #{tpu_custom_call.1} parent=0
    #allocation2 [shape = 'u8[4096]{0}', space=vmem, size = 0x1000, scoped, tag = 'input window, operand 0, single buffered']
    #allocation3 [shape = 's32[1]{0}', space=sflag, size = 0x4, scoped, tag = 'scoped memory for tpu_custom_call.1']
    #allocation4 [shape = 's32[1]{0}', space=sflag, size = 0x4, scoped, tag = 'scoped memory for tpu_custom_call.1']
    #allocation5 [shape = 'u8[131072]{0}', space=vmem, size = 0x20000, scoped, tag = 'input window, operand 1, single buffered']
    #allocation6 [shape = 's32[1]{0}', space=sflag, size = 0x4, scoped, tag = 'scoped memory for tpu_custom_call.1']
    #allocation7 [shape = 'u8[4096]{0}', space=vmem, size = 0x1000, scoped, tag = 'output window, operand 0, single buffered']
    %7 = vsyncpa [#allocation3], 0
    %8 = vsyncpa [#allocation6], 0
    %9 = vsyncpa [#allocation4], 0
    // Predicated region
    $region2: #{tpu_custom_call.1} parent=1 // pred_check
      _
    $region3: #{tpu_custom_call.1} parent=1 // pred_check_branch
      %11 = sbr.rel (0) target = $region5
    $region4: #{tpu_custom_call.1} parent=1 // pred_region
      %13 = vsyncadd [#allocation3], 0
      %s15 = sshll.u32 %s0, 4
      %s16 = int_to_ptr.hbm [resolvable:$true] %s15
      %s17 = sshll.u32 [#allocation2], 4
      %s18 = int_to_ptr.vmem [resolvable:$true] %s17
      %20 = dma.hbm_to_vmem [thread:$0]  %s16, 128, %s18, [#allocation3]
    $region5: #{tpu_custom_call.1} parent=1 // pred_fallthru
      _
    // Predicated region
    $region6: #{tpu_custom_call.1} parent=1 // pred_check
      _
    $region7: #{tpu_custom_call.1} parent=1 // pred_check_branch
      %22 = sbr.rel (0) target = $region9
    $region8: #{tpu_custom_call.1} parent=1 // pred_region
      %24 = vsyncadd [#allocation6], 0
      %s25 = sshll.u32 %s1, 4
      %s26 = int_to_ptr.hbm [resolvable:$true] %s25
      %s27 = sshll.u32 [#allocation5], 4
      %s28 = int_to_ptr.vmem [resolvable:$true] %s27
      %33 = dma.hbm_to_vmem [thread:$0]  %s26, 4096, %s28, [#allocation6], 1024, 1024, 64
    $region9: #{tpu_custom_call.1} parent=1 // pred_fallthru
      _
    // Predicated region
    $region10: #{tpu_custom_call.1} parent=1 // pred_check
      _
    $region11: #{tpu_custom_call.1} parent=1 // pred_check_branch
      %35 = sbr.rel (0) target = $region13
    $region12: #{tpu_custom_call.1} parent=1 // pred_region
      %37 = dma.done [#allocation3], 128
    $region13: #{tpu_custom_call.1} parent=1 // pred_fallthru
      _
    // Predicated region
    $region14: #{tpu_custom_call.1} parent=1 // pred_check
      _
    $region15: #{tpu_custom_call.1} parent=1 // pred_check_branch
      %39 = sbr.rel (0) target = $region17
    $region16: #{tpu_custom_call.1} parent=1 // pred_region
      %41 = dma.done [#allocation6], 4096
    $region17: #{tpu_custom_call.1} parent=1 // pred_fallthru
      _
    %v42 = vld [vmem:[#allocation2] sm:$0xff]
    %v43 = vld [vmem:[#allocation5] sm:$0xff]
    %v44 = vld [vmem:[#allocation5 + $0x8] sm:$0xff]
    %v45 = vld [vmem:[#allocation5 + $0x10] sm:$0xff]
    %v46 = vld [vmem:[#allocation5 + $0x18] sm:$0xff]
    %v47 = vld [vmem:[#allocation5 + $0x20] sm:$0xff]
    %v48 = vld [vmem:[#allocation5 + $0x28] sm:$0xff]
    %v49 = vld [vmem:[#allocation5 + $0x30] sm:$0xff]
    %v50 = vld [vmem:[#allocation5 + $0x38] sm:$0xff]
    %v51 = vld [vmem:[#allocation5 + $0x40] sm:$0xff]
    %v52 = vld [vmem:[#allocation5 + $0x48] sm:$0xff]
    %v53 = vld [vmem:[#allocation5 + $0x50] sm:$0xff]
    %v54 = vld [vmem:[#allocation5 + $0x58] sm:$0xff]
    %v55 = vld [vmem:[#allocation5 + $0x60] sm:$0xff]
    %v56 = vld [vmem:[#allocation5 + $0x68] sm:$0xff]
    %v57 = vld [vmem:[#allocation5 + $0x70] sm:$0xff]
    %v58 = vld [vmem:[#allocation5 + $0x78] sm:$0xff]
    %v59 = vld [vmem:[#allocation5 + $0x80] sm:$0xff]
    %v60 = vld [vmem:[#allocation5 + $0x88] sm:$0xff]
    %v61 = vld [vmem:[#allocation5 + $0x90] sm:$0xff]
    %v62 = vld [vmem:[#allocation5 + $0x98] sm:$0xff]
    %v63 = vld [vmem:[#allocation5 + $0xa0] sm:$0xff]
    %v64 = vld [vmem:[#allocation5 + $0xa8] sm:$0xff]
    %v65 = vld [vmem:[#allocation5 + $0xb0] sm:$0xff]
    %v66 = vld [vmem:[#allocation5 + $0xb8] sm:$0xff]
    %v67 = vld [vmem:[#allocation5 + $0xc0] sm:$0xff]
    %v68 = vld [vmem:[#allocation5 + $0xc8] sm:$0xff]
    %v69 = vld [vmem:[#allocation5 + $0xd0] sm:$0xff]
    %v70 = vld [vmem:[#allocation5 + $0xd8] sm:$0xff]
    %v71 = vld [vmem:[#allocation5 + $0xe0] sm:$0xff]
    %v72 = vld [vmem:[#allocation5 + $0xe8] sm:$0xff]
    %v73 = vld [vmem:[#allocation5 + $0xf0] sm:$0xff]
    %v74 = vld [vmem:[#allocation5 + $0xf8] sm:$0xff]
    %vm75 = vcmask 261120
    %v77 = vsel %vm75, %v42, 0
    %79 = vmatpush.msra.mxu0 0.0
    %80 = vmatpush.msra.mxu0 0.0
    %81 = vmatpush.msra.mxu0 0.0
    %82 = vmatpush.msra.mxu0 0.0
    %83 = vmatpush.msra.mxu0 0.0
    %84 = vmatpush.msra.mxu0 0.0
    %85 = vmatpush.msra.mxu0 0.0
    %86 = vmatpush.msra.mxu0 0.0
    %87 = vmatpush.msra.mxu0 0.0
    %88 = vmatpush.msra.mxu0 0.0
    %89 = vmatpush.msra.mxu0 0.0
    %90 = vmatpush.msra.mxu0 0.0
    %v91 = vand.u32 %v67, 4294901760
    %92 = vmatpush.msra.mxu0 %v91
    %v93 = vand.u32 %v59, 4294901760
    %94 = vmatpush.msra.mxu0 %v93
    %v95 = vand.u32 %v51, 4294901760
    %96 = vmatpush.msra.mxu0 %v95
    %v97 = vand.u32 %v43, 4294901760
    %98 = vmatpush.msra.mxu0 %v97
    %v99 = vand.u32 %v77, 4294901760
    %v100 = vsub.f32 %v77, %v99
    %v101 = vand.u32 %v100, 4294901760
    %v102 = vsub.f32 %v100, %v101
    %v103 = vand.u32 %v102, 4294901760
    %104 = vmatmul.f32.gmra.mxu0 %v103
    %v105 = vpop.f32.mrf.mxu0
    %v106 = vadd.f32 0.0, %v105
    %107 = vdwg.mxu0
    %108 = vmatpush.msra.mxu0 0.0
    %109 = vmatpush.msra.mxu0 0.0
    %110 = vmatpush.msra.mxu0 0.0
    %111 = vmatpush.msra.mxu0 0.0
    %112 = vmatpush.msra.mxu0 0.0
    %113 = vmatpush.msra.mxu0 0.0
    %114 = vmatpush.msra.mxu0 0.0
    %115 = vmatpush.msra.mxu0 0.0
    %116 = vmatpush.msra.mxu0 0.0
    %117 = vmatpush.msra.mxu0 0.0
    %118 = vmatpush.msra.mxu0 0.0
    %119 = vmatpush.msra.mxu0 0.0
    %v120 = vand.u32 %v67, 4294901760
    %v121 = vsub.f32 %v67, %v120
    %v122 = vand.u32 %v121, 4294901760
    %v123 = vsub.f32 %v121, %v122
    %v124 = vand.u32 %v123, 4294901760
    %125 = vmatpush.msra.mxu0 %v124
    %v126 = vand.u32 %v59, 4294901760
    %v127 = vsub.f32 %v59, %v126
    %v128 = vand.u32 %v127, 4294901760
    %v129 = vsub.f32 %v127, %v128
    %v130 = vand.u32 %v129, 4294901760
    %131 = vmatpush.msra.mxu0 %v130
    %v132 = vand.u32 %v51, 4294901760
    %v133 = vsub.f32 %v51, %v132
    %v134 = vand.u32 %v133, 4294901760
    %v135 = vsub.f32 %v133, %v134
    %v136 = vand.u32 %v135, 4294901760
    %137 = vmatpush.msra.mxu0 %v136
    %v138 = vand.u32 %v43, 4294901760
    %v139 = vsub.f32 %v43, %v138
    %v140 = vand.u32 %v139, 4294901760
    %v141 = vsub.f32 %v139, %v140
    %v142 = vand.u32 %v141, 4294901760
    %143 = vmatpush.msra.mxu0 %v142
    %v144 = vand.u32 %v77, 4294901760
    %145 = vmatmul.f32.gmra.mxu0 %v144
    %v146 = vpop.f32.mrf.mxu0
    %v147 = vadd.f32 %v106, %v146
    %148 = vdwg.mxu0
    %149 = vmatpush.msra.mxu0 0.0
    %150 = vmatpush.msra.mxu0 0.0
    %151 = vmatpush.msra.mxu0 0.0
    %152 = vmatpush.msra.mxu0 0.0
    %153 = vmatpush.msra.mxu0 0.0
    %154 = vmatpush.msra.mxu0 0.0
    %155 = vmatpush.msra.mxu0 0.0
    %156 = vmatpush.msra.mxu0 0.0
    %157 = vmatpush.msra.mxu0 0.0
    %158 = vmatpush.msra.mxu0 0.0
    %159 = vmatpush.msra.mxu0 0.0
    %160 = vmatpush.msra.mxu0 0.0
    %v161 = vand.u32 %v67, 4294901760
    %v162 = vsub.f32 %v67, %v161
    %163 = vmatpush.msra.mxu0 %v162
    %v164 = vand.u32 %v59, 4294901760
    %v165 = vsub.f32 %v59, %v164
    %166 = vmatpush.msra.mxu0 %v165
    %v167 = vand.u32 %v51, 4294901760
    %v168 = vsub.f32 %v51, %v167
    %169 = vmatpush.msra.mxu0 %v168
    %v170 = vand.u32 %v43, 4294901760
    %v171 = vsub.f32 %v43, %v170
    %172 = vmatpush.msra.mxu0 %v171
    %v173 = vand.u32 %v77, 4294901760
    %v174 = vsub.f32 %v77, %v173
    %175 = vmatmul.f32.gmra.mxu0 %v174
    %v176 = vpop.f32.mrf.mxu0
    %v177 = vadd.f32 %v147, %v176
    %178 = vdwg.mxu0
    %179 = vmatpush.msra.mxu0 0.0
    %180 = vmatpush.msra.mxu0 0.0
    %181 = vmatpush.msra.mxu0 0.0
    %182 = vmatpush.msra.mxu0 0.0
    %183 = vmatpush.msra.mxu0 0.0
    %184 = vmatpush.msra.mxu0 0.0
    %185 = vmatpush.msra.mxu0 0.0
    %186 = vmatpush.msra.mxu0 0.0
    %187 = vmatpush.msra.mxu0 0.0
    %188 = vmatpush.msra.mxu0 0.0
    %189 = vmatpush.msra.mxu0 0.0
    %190 = vmatpush.msra.mxu0 0.0
    %v191 = vand.u32 %v67, 4294901760
    %192 = vmatpush.msra.mxu0 %v191
    %v193 = vand.u32 %v59, 4294901760
    %194 = vmatpush.msra.mxu0 %v193
    %v195 = vand.u32 %v51, 4294901760
    %196 = vmatpush.msra.mxu0 %v195
    %v197 = vand.u32 %v43, 4294901760
    %198 = vmatpush.msra.mxu0 %v197
    %v199 = vand.u32 %v77, 4294901760
    %v200 = vsub.f32 %v77, %v199
    %v201 = vand.u32 %v200, 4294901760
    %202 = vmatmul.f32.gmra.mxu0 %v201
    %v203 = vpop.f32.mrf.mxu0
    %v204 = vadd.f32 %v177, %v203
    %205 = vdwg.mxu0
    %206 = vmatpush.msra.mxu0 0.0
    %207 = vmatpush.msra.mxu0 0.0
    %208 = vmatpush.msra.mxu0 0.0
    %209 = vmatpush.msra.mxu0 0.0
    %210 = vmatpush.msra.mxu0 0.0
    %211 = vmatpush.msra.mxu0 0.0
    %212 = vmatpush.msra.mxu0 0.0
    %213 = vmatpush.msra.mxu0 0.0
    %214 = vmatpush.msra.mxu0 0.0
    %215 = vmatpush.msra.mxu0 0.0
    %216 = vmatpush.msra.mxu0 0.0
    %217 = vmatpush.msra.mxu0 0.0
    %v218 = vand.u32 %v67, 4294901760
    %v219 = vsub.f32 %v67, %v218
    %v220 = vand.u32 %v219, 4294901760
    %221 = vmatpush.msra.mxu0 %v220
    %v222 = vand.u32 %v59, 4294901760
    %v223 = vsub.f32 %v59, %v222
    %v224 = vand.u32 %v223, 4294901760
    %225 = vmatpush.msra.mxu0 %v224
    %v226 = vand.u32 %v51, 4294901760
    %v227 = vsub.f32 %v51, %v226
    %v228 = vand.u32 %v227, 4294901760
    %229 = vmatpush.msra.mxu0 %v228
    %v230 = vand.u32 %v43, 4294901760
    %v231 = vsub.f32 %v43, %v230
    %v232 = vand.u32 %v231, 4294901760
    %233 = vmatpush.msra.mxu0 %v232
    %v234 = vand.u32 %v77, 4294901760
    %235 = vmatmul.f32.gmra.mxu0 %v234
    %v236 = vpop.f32.mrf.mxu0
    %v237 = vadd.f32 %v204, %v236
    %238 = vdwg.mxu0
    %239 = vmatpush.msra.mxu0 0.0
    %240 = vmatpush.msra.mxu0 0.0
    %241 = vmatpush.msra.mxu0 0.0
    %242 = vmatpush.msra.mxu0 0.0
    %243 = vmatpush.msra.mxu0 0.0
    %244 = vmatpush.msra.mxu0 0.0
    %245 = vmatpush.msra.mxu0 0.0
    %246 = vmatpush.msra.mxu0 0.0
    %247 = vmatpush.msra.mxu0 0.0
    %248 = vmatpush.msra.mxu0 0.0
    %249 = vmatpush.msra.mxu0 0.0
    %250 = vmatpush.msra.mxu0 0.0
    %v251 = vand.u32 %v67, 4294901760
    %252 = vmatpush.msra.mxu0 %v251
    %v253 = vand.u32 %v59, 4294901760
    %254 = vmatpush.msra.mxu0 %v253
    %v255 = vand.u32 %v51, 4294901760
    %256 = vmatpush.msra.mxu0 %v255
    %v257 = vand.u32 %v43, 4294901760
    %258 = vmatpush.msra.mxu0 %v257
    %v259 = vand.u32 %v77, 4294901760
    %260 = vmatmul.f32.gmra.mxu0 %v259
    %v261 = vpop.f32.mrf.mxu0
    %v262 = vadd.f32 %v237, %v261
    %263 = vdwg.mxu0
    %264 = vmatpush.msra.mxu0 0.0
    %265 = vmatpush.msra.mxu0 0.0
    %266 = vmatpush.msra.mxu0 0.0
    %267 = vmatpush.msra.mxu0 0.0
    %268 = vmatpush.msra.mxu0 0.0
    %269 = vmatpush.msra.mxu0 0.0
    %270 = vmatpush.msra.mxu0 0.0
    %271 = vmatpush.msra.mxu0 0.0
    %272 = vmatpush.msra.mxu0 0.0
    %273 = vmatpush.msra.mxu0 0.0
    %274 = vmatpush.msra.mxu0 0.0
    %275 = vmatpush.msra.mxu0 0.0
    %v276 = vand.u32 %v68, 4294901760
    %277 = vmatpush.msra.mxu0 %v276
    %v278 = vand.u32 %v60, 4294901760
    %279 = vmatpush.msra.mxu0 %v278
    %v280 = vand.u32 %v52, 4294901760
    %281 = vmatpush.msra.mxu0 %v280
    %v282 = vand.u32 %v44, 4294901760
    %283 = vmatpush.msra.mxu0 %v282
    %v284 = vand.u32 %v77, 4294901760
    %v285 = vsub.f32 %v77, %v284
    %v286 = vand.u32 %v285, 4294901760
    %v287 = vsub.f32 %v285, %v286
    %v288 = vand.u32 %v287, 4294901760
    %289 = vmatmul.f32.gmra.mxu0 %v288
    %v290 = vpop.f32.mrf.mxu0
    %v291 = vadd.f32 0.0, %v290
    %292 = vdwg.mxu0
    %293 = vmatpush.msra.mxu0 0.0
    %294 = vmatpush.msra.mxu0 0.0
    %295 = vmatpush.msra.mxu0 0.0
    %296 = vmatpush.msra.mxu0 0.0
    %297 = vmatpush.msra.mxu0 0.0
    %298 = vmatpush.msra.mxu0 0.0
    %299 = vmatpush.msra.mxu0 0.0
    %300 = vmatpush.msra.mxu0 0.0
    %301 = vmatpush.msra.mxu0 0.0
    %302 = vmatpush.msra.mxu0 0.0
    %303 = vmatpush.msra.mxu0 0.0
    %304 = vmatpush.msra.mxu0 0.0
    %v305 = vand.u32 %v68, 4294901760
    %v306 = vsub.f32 %v68, %v305
    %v307 = vand.u32 %v306, 4294901760
    %v308 = vsub.f32 %v306, %v307
    %v309 = vand.u32 %v308, 4294901760
    %310 = vmatpush.msra.mxu0 %v309
    %v311 = vand.u32 %v60, 4294901760
    %v312 = vsub.f32 %v60, %v311
    %v313 = vand.u32 %v312, 4294901760
    %v314 = vsub.f32 %v312, %v313
    %v315 = vand.u32 %v314, 4294901760
    %316 = vmatpush.msra.mxu0 %v315
    %v317 = vand.u32 %v52, 4294901760
    %v318 = vsub.f32 %v52, %v317
    %v319 = vand.u32 %v318, 4294901760
    %v320 = vsub.f32 %v318, %v319
    %v321 = vand.u32 %v320, 4294901760
    %322 = vmatpush.msra.mxu0 %v321
    %v323 = vand.u32 %v44, 4294901760
    %v324 = vsub.f32 %v44, %v323
    %v325 = vand.u32 %v324, 4294901760
    %v326 = vsub.f32 %v324, %v325
    %v327 = vand.u32 %v326, 4294901760
    %328 = vmatpush.msra.mxu0 %v327
    %v329 = vand.u32 %v77, 4294901760
    %330 = vmatmul.f32.gmra.mxu0 %v329
    %v331 = vpop.f32.mrf.mxu0
    %v332 = vadd.f32 %v291, %v331
    %333 = vdwg.mxu0
    %334 = vmatpush.msra.mxu0 0.0
    %335 = vmatpush.msra.mxu0 0.0
    %336 = vmatpush.msra.mxu0 0.0
    %337 = vmatpush.msra.mxu0 0.0
    %338 = vmatpush.msra.mxu0 0.0
    %339 = vmatpush.msra.mxu0 0.0
    %340 = vmatpush.msra.mxu0 0.0
    %341 = vmatpush.msra.mxu0 0.0
    %342 = vmatpush.msra.mxu0 0.0
    %343 = vmatpush.msra.mxu0 0.0
    %344 = vmatpush.msra.mxu0 0.0
    %345 = vmatpush.msra.mxu0 0.0
    %v346 = vand.u32 %v68, 4294901760
    %v347 = vsub.f32 %v68, %v346
    %348 = vmatpush.msra.mxu0 %v347
    %v349 = vand.u32 %v60, 4294901760
    %v350 = vsub.f32 %v60, %v349
    %351 = vmatpush.msra.mxu0 %v350
    %v352 = vand.u32 %v52, 4294901760
    %v353 = vsub.f32 %v52, %v352
    %354 = vmatpush.msra.mxu0 %v353
    %v355 = vand.u32 %v44, 4294901760
    %v356 = vsub.f32 %v44, %v355
    %357 = vmatpush.msra.mxu0 %v356
    %v358 = vand.u32 %v77, 4294901760
    %v359 = vsub.f32 %v77, %v358
    %360 = vmatmul.f32.gmra.mxu0 %v359
    %v361 = vpop.f32.mrf.mxu0
    %v362 = vadd.f32 %v332, %v361
    %363 = vdwg.mxu0
    %364 = vmatpush.msra.mxu0 0.0
    %365 = vmatpush.msra.mxu0 0.0
    %366 = vmatpush.msra.mxu0 0.0
    %367 = vmatpush.msra.mxu0 0.0
    %368 = vmatpush.msra.mxu0 0.0
    %369 = vmatpush.msra.mxu0 0.0
    %370 = vmatpush.msra.mxu0 0.0
    %371 = vmatpush.msra.mxu0 0.0
    %372 = vmatpush.msra.mxu0 0.0
    %373 = vmatpush.msra.mxu0 0.0
    %374 = vmatpush.msra.mxu0 0.0
    %375 = vmatpush.msra.mxu0 0.0
    %v376 = vand.u32 %v68, 4294901760
    %377 = vmatpush.msra.mxu0 %v376
    %v378 = vand.u32 %v60, 4294901760
    %379 = vmatpush.msra.mxu0 %v378
    %v380 = vand.u32 %v52, 4294901760
    %381 = vmatpush.msra.mxu0 %v380
    %v382 = vand.u32 %v44, 4294901760
    %383 = vmatpush.msra.mxu0 %v382
    %v384 = vand.u32 %v77, 4294901760
    %v385 = vsub.f32 %v77, %v384
    %v386 = vand.u32 %v385, 4294901760
    %387 = vmatmul.f32.gmra.mxu0 %v386
    %v388 = vpop.f32.mrf.mxu0
    %v389 = vadd.f32 %v362, %v388
    %390 = vdwg.mxu0
    %391 = vmatpush.msra.mxu0 0.0
    %392 = vmatpush.msra.mxu0 0.0
    %393 = vmatpush.msra.mxu0 0.0
    %394 = vmatpush.msra.mxu0 0.0
    %395 = vmatpush.msra.mxu0 0.0
    %396 = vmatpush.msra.mxu0 0.0
    %397 = vmatpush.msra.mxu0 0.0
    %398 = vmatpush.msra.mxu0 0.0
    %399 = vmatpush.msra.mxu0 0.0
    %400 = vmatpush.msra.mxu0 0.0
    %401 = vmatpush.msra.mxu0 0.0
    %402 = vmatpush.msra.mxu0 0.0
    %v403 = vand.u32 %v68, 4294901760
    %v404 = vsub.f32 %v68, %v403
    %v405 = vand.u32 %v404, 4294901760
    %406 = vmatpush.msra.mxu0 %v405
    %v407 = vand.u32 %v60, 4294901760
    %v408 = vsub.f32 %v60, %v407
    %v409 = vand.u32 %v408, 4294901760
    %410 = vmatpush.msra.mxu0 %v409
    %v411 = vand.u32 %v52, 4294901760
    %v412 = vsub.f32 %v52, %v411
    %v413 = vand.u32 %v412, 4294901760
    %414 = vmatpush.msra.mxu0 %v413
    %v415 = vand.u32 %v44, 4294901760
    %v416 = vsub.f32 %v44, %v415
    %v417 = vand.u32 %v416, 4294901760
    %418 = vmatpush.msra.mxu0 %v417
    %v419 = vand.u32 %v77, 4294901760
    %420 = vmatmul.f32.gmra.mxu0 %v419
    %v421 = vpop.f32.mrf.mxu0
    %v422 = vadd.f32 %v389, %v421
    %423 = vdwg.mxu0
    %424 = vmatpush.msra.mxu0 0.0
    %425 = vmatpush.msra.mxu0 0.0
    %426 = vmatpush.msra.mxu0 0.0
    %427 = vmatpush.msra.mxu0 0.0
    %428 = vmatpush.msra.mxu0 0.0
    %429 = vmatpush.msra.mxu0 0.0
    %430 = vmatpush.msra.mxu0 0.0
    %431 = vmatpush.msra.mxu0 0.0
    %432 = vmatpush.msra.mxu0 0.0
    %433 = vmatpush.msra.mxu0 0.0
    %434 = vmatpush.msra.mxu0 0.0
    %435 = vmatpush.msra.mxu0 0.0
    %v436 = vand.u32 %v68, 4294901760
    %437 = vmatpush.msra.mxu0 %v436
    %v438 = vand.u32 %v60, 4294901760
    %439 = vmatpush.msra.mxu0 %v438
    %v440 = vand.u32 %v52, 4294901760
    %441 = vmatpush.msra.mxu0 %v440
    %v442 = vand.u32 %v44, 4294901760
    %443 = vmatpush.msra.mxu0 %v442
    %v444 = vand.u32 %v77, 4294901760
    %445 = vmatmul.f32.gmra.mxu0 %v444
    %v446 = vpop.f32.mrf.mxu0
    %v447 = vadd.f32 %v422, %v446
    %448 = vdwg.mxu0
    %449 = vmatpush.msra.mxu0 0.0
    %450 = vmatpush.msra.mxu0 0.0
    %451 = vmatpush.msra.mxu0 0.0
    %452 = vmatpush.msra.mxu0 0.0
    %453 = vmatpush.msra.mxu0 0.0
    %454 = vmatpush.msra.mxu0 0.0
    %455 = vmatpush.msra.mxu0 0.0
    %456 = vmatpush.msra.mxu0 0.0
    %457 = vmatpush.msra.mxu0 0.0
    %458 = vmatpush.msra.mxu0 0.0
    %459 = vmatpush.msra.mxu0 0.0
    %460 = vmatpush.msra.mxu0 0.0
    %v461 = vand.u32 %v69, 4294901760
    %462 = vmatpush.msra.mxu0 %v461
    %v463 = vand.u32 %v61, 4294901760
    %464 = vmatpush.msra.mxu0 %v463
    %v465 = vand.u32 %v53, 4294901760
    %466 = vmatpush.msra.mxu0 %v465
    %v467 = vand.u32 %v45, 4294901760
    %468 = vmatpush.msra.mxu0 %v467
    %v469 = vand.u32 %v77, 4294901760
    %v470 = vsub.f32 %v77, %v469
    %v471 = vand.u32 %v470, 4294901760
    %v472 = vsub.f32 %v470, %v471
    %v473 = vand.u32 %v472, 4294901760
    %474 = vmatmul.f32.gmra.mxu0 %v473
    %v475 = vpop.f32.mrf.mxu0
    %v476 = vadd.f32 0.0, %v475
    %477 = vdwg.mxu0
    %478 = vmatpush.msra.mxu0 0.0
    %479 = vmatpush.msra.mxu0 0.0
    %480 = vmatpush.msra.mxu0 0.0
    %481 = vmatpush.msra.mxu0 0.0
    %482 = vmatpush.msra.mxu0 0.0
    %483 = vmatpush.msra.mxu0 0.0
    %484 = vmatpush.msra.mxu0 0.0
    %485 = vmatpush.msra.mxu0 0.0
    %486 = vmatpush.msra.mxu0 0.0
    %487 = vmatpush.msra.mxu0 0.0
    %488 = vmatpush.msra.mxu0 0.0
    %489 = vmatpush.msra.mxu0 0.0
    %v490 = vand.u32 %v69, 4294901760
    %v491 = vsub.f32 %v69, %v490
    %v492 = vand.u32 %v491, 4294901760
    %v493 = vsub.f32 %v491, %v492
    %v494 = vand.u32 %v493, 4294901760
    %495 = vmatpush.msra.mxu0 %v494
    %v496 = vand.u32 %v61, 4294901760
    %v497 = vsub.f32 %v61, %v496
    %v498 = vand.u32 %v497, 4294901760
    %v499 = vsub.f32 %v497, %v498
    %v500 = vand.u32 %v499, 4294901760
    %501 = vmatpush.msra.mxu0 %v500
    %v502 = vand.u32 %v53, 4294901760
    %v503 = vsub.f32 %v53, %v502
    %v504 = vand.u32 %v503, 4294901760
    %v505 = vsub.f32 %v503, %v504
    %v506 = vand.u32 %v505, 4294901760
    %507 = vmatpush.msra.mxu0 %v506
    %v508 = vand.u32 %v45, 4294901760
    %v509 = vsub.f32 %v45, %v508
    %v510 = vand.u32 %v509, 4294901760
    %v511 = vsub.f32 %v509, %v510
    %v512 = vand.u32 %v511, 4294901760
    %513 = vmatpush.msra.mxu0 %v512
    %v514 = vand.u32 %v77, 4294901760
    %515 = vmatmul.f32.gmra.mxu0 %v514
    %v516 = vpop.f32.mrf.mxu0
    %v517 = vadd.f32 %v476, %v516
    %518 = vdwg.mxu0
    %519 = vmatpush.msra.mxu0 0.0
    %520 = vmatpush.msra.mxu0 0.0
    %521 = vmatpush.msra.mxu0 0.0
    %522 = vmatpush.msra.mxu0 0.0
    %523 = vmatpush.msra.mxu0 0.0
    %524 = vmatpush.msra.mxu0 0.0
    %525 = vmatpush.msra.mxu0 0.0
    %526 = vmatpush.msra.mxu0 0.0
    %527 = vmatpush.msra.mxu0 0.0
    %528 = vmatpush.msra.mxu0 0.0
    %529 = vmatpush.msra.mxu0 0.0
    %530 = vmatpush.msra.mxu0 0.0
    %v531 = vand.u32 %v69, 4294901760
    %v532 = vsub.f32 %v69, %v531
    %533 = vmatpush.msra.mxu0 %v532
    %v534 = vand.u32 %v61, 4294901760
    %v535 = vsub.f32 %v61, %v534
    %536 = vmatpush.msra.mxu0 %v535
    %v537 = vand.u32 %v53, 4294901760
    %v538 = vsub.f32 %v53, %v537
    %539 = vmatpush.msra.mxu0 %v538
    %v540 = vand.u32 %v45, 4294901760
    %v541 = vsub.f32 %v45, %v540
    %542 = vmatpush.msra.mxu0 %v541
    %v543 = vand.u32 %v77, 4294901760
    %v544 = vsub.f32 %v77, %v543
    %545 = vmatmul.f32.gmra.mxu0 %v544
    %v546 = vpop.f32.mrf.mxu0
    %v547 = vadd.f32 %v517, %v546
    %548 = vdwg.mxu0
    %549 = vmatpush.msra.mxu0 0.0
    %550 = vmatpush.msra.mxu0 0.0
    %551 = vmatpush.msra.mxu0 0.0
    %552 = vmatpush.msra.mxu0 0.0
    %553 = vmatpush.msra.mxu0 0.0
    %554 = vmatpush.msra.mxu0 0.0
    %555 = vmatpush.msra.mxu0 0.0
    %556 = vmatpush.msra.mxu0 0.0
    %557 = vmatpush.msra.mxu0 0.0
    %558 = vmatpush.msra.mxu0 0.0
    %559 = vmatpush.msra.mxu0 0.0
    %560 = vmatpush.msra.mxu0 0.0
    %v561 = vand.u32 %v69, 4294901760
    %562 = vmatpush.msra.mxu0 %v561
    %v563 = vand.u32 %v61, 4294901760
    %564 = vmatpush.msra.mxu0 %v563
    %v565 = vand.u32 %v53, 4294901760
    %566 = vmatpush.msra.mxu0 %v565
    %v567 = vand.u32 %v45, 4294901760
    %568 = vmatpush.msra.mxu0 %v567
    %v569 = vand.u32 %v77, 4294901760
    %v570 = vsub.f32 %v77, %v569
    %v571 = vand.u32 %v570, 4294901760
    %572 = vmatmul.f32.gmra.mxu0 %v571
    %v573 = vpop.f32.mrf.mxu0
    %v574 = vadd.f32 %v547, %v573
    %575 = vdwg.mxu0
    %576 = vmatpush.msra.mxu0 0.0
    %577 = vmatpush.msra.mxu0 0.0
    %578 = vmatpush.msra.mxu0 0.0
    %579 = vmatpush.msra.mxu0 0.0
    %580 = vmatpush.msra.mxu0 0.0
    %581 = vmatpush.msra.mxu0 0.0
    %582 = vmatpush.msra.mxu0 0.0
    %583 = vmatpush.msra.mxu0 0.0
    %584 = vmatpush.msra.mxu0 0.0
    %585 = vmatpush.msra.mxu0 0.0
    %586 = vmatpush.msra.mxu0 0.0
    %587 = vmatpush.msra.mxu0 0.0
    %v588 = vand.u32 %v69, 4294901760
    %v589 = vsub.f32 %v69, %v588
    %v590 = vand.u32 %v589, 4294901760
    %591 = vmatpush.msra.mxu0 %v590
    %v592 = vand.u32 %v61, 4294901760
    %v593 = vsub.f32 %v61, %v592
    %v594 = vand.u32 %v593, 4294901760
    %595 = vmatpush.msra.mxu0 %v594
    %v596 = vand.u32 %v53, 4294901760
    %v597 = vsub.f32 %v53, %v596
    %v598 = vand.u32 %v597, 4294901760
    %599 = vmatpush.msra.mxu0 %v598
    %v600 = vand.u32 %v45, 4294901760
    %v601 = vsub.f32 %v45, %v600
    %v602 = vand.u32 %v601, 4294901760
    %603 = vmatpush.msra.mxu0 %v602
    %v604 = vand.u32 %v77, 4294901760
    %605 = vmatmul.f32.gmra.mxu0 %v604
    %v606 = vpop.f32.mrf.mxu0
    %v607 = vadd.f32 %v574, %v606
    %608 = vdwg.mxu0
    %609 = vmatpush.msra.mxu0 0.0
    %610 = vmatpush.msra.mxu0 0.0
    %611 = vmatpush.msra.mxu0 0.0
    %612 = vmatpush.msra.mxu0 0.0
    %613 = vmatpush.msra.mxu0 0.0
    %614 = vmatpush.msra.mxu0 0.0
    %615 = vmatpush.msra.mxu0 0.0
    %616 = vmatpush.msra.mxu0 0.0
    %617 = vmatpush.msra.mxu0 0.0
    %618 = vmatpush.msra.mxu0 0.0
    %619 = vmatpush.msra.mxu0 0.0
    %620 = vmatpush.msra.mxu0 0.0
    %v621 = vand.u32 %v69, 4294901760
    %622 = vmatpush.msra.mxu0 %v621
    %v623 = vand.u32 %v61, 4294901760
    %624 = vmatpush.msra.mxu0 %v623
    %v625 = vand.u32 %v53, 4294901760
    %626 = vmatpush.msra.mxu0 %v625
    %v627 = vand.u32 %v45, 4294901760
    %628 = vmatpush.msra.mxu0 %v627
    %v629 = vand.u32 %v77, 4294901760
    %630 = vmatmul.f32.gmra.mxu0 %v629
    %v631 = vpop.f32.mrf.mxu0
    %v632 = vadd.f32 %v607, %v631
    %633 = vdwg.mxu0
    %634 = vmatpush.msra.mxu0 0.0
    %635 = vmatpush.msra.mxu0 0.0
    %636 = vmatpush.msra.mxu0 0.0
    %637 = vmatpush.msra.mxu0 0.0
    %638 = vmatpush.msra.mxu0 0.0
    %639 = vmatpush.msra.mxu0 0.0
    %640 = vmatpush.msra.mxu0 0.0
    %641 = vmatpush.msra.mxu0 0.0
    %642 = vmatpush.msra.mxu0 0.0
    %643 = vmatpush.msra.mxu0 0.0
    %644 = vmatpush.msra.mxu0 0.0
    %645 = vmatpush.msra.mxu0 0.0
    %v646 = vand.u32 %v70, 4294901760
    %647 = vmatpush.msra.mxu0 %v646
    %v648 = vand.u32 %v62, 4294901760
    %649 = vmatpush.msra.mxu0 %v648
    %v650 = vand.u32 %v54, 4294901760
    %651 = vmatpush.msra.mxu0 %v650
    %v652 = vand.u32 %v46, 4294901760
    %653 = vmatpush.msra.mxu0 %v652
    %v654 = vand.u32 %v77, 4294901760
    %v655 = vsub.f32 %v77, %v654
    %v656 = vand.u32 %v655, 4294901760
    %v657 = vsub.f32 %v655, %v656
    %v658 = vand.u32 %v657, 4294901760
    %659 = vmatmul.f32.gmra.mxu0 %v658
    %v660 = vpop.f32.mrf.mxu0
    %v661 = vadd.f32 0.0, %v660
    %662 = vdwg.mxu0
    %663 = vmatpush.msra.mxu0 0.0
    %664 = vmatpush.msra.mxu0 0.0
    %665 = vmatpush.msra.mxu0 0.0
    %666 = vmatpush.msra.mxu0 0.0
    %667 = vmatpush.msra.mxu0 0.0
    %668 = vmatpush.msra.mxu0 0.0
    %669 = vmatpush.msra.mxu0 0.0
    %670 = vmatpush.msra.mxu0 0.0
    %671 = vmatpush.msra.mxu0 0.0
    %672 = vmatpush.msra.mxu0 0.0
    %673 = vmatpush.msra.mxu0 0.0
    %674 = vmatpush.msra.mxu0 0.0
    %v675 = vand.u32 %v70, 4294901760
    %v676 = vsub.f32 %v70, %v675
    %v677 = vand.u32 %v676, 4294901760
    %v678 = vsub.f32 %v676, %v677
    %v679 = vand.u32 %v678, 4294901760
    %680 = vmatpush.msra.mxu0 %v679
    %v681 = vand.u32 %v62, 4294901760
    %v682 = vsub.f32 %v62, %v681
    %v683 = vand.u32 %v682, 4294901760
    %v684 = vsub.f32 %v682, %v683
    %v685 = vand.u32 %v684, 4294901760
    %686 = vmatpush.msra.mxu0 %v685
    %v687 = vand.u32 %v54, 4294901760
    %v688 = vsub.f32 %v54, %v687
    %v689 = vand.u32 %v688, 4294901760
    %v690 = vsub.f32 %v688, %v689
    %v691 = vand.u32 %v690, 4294901760
    %692 = vmatpush.msra.mxu0 %v691
    %v693 = vand.u32 %v46, 4294901760
    %v694 = vsub.f32 %v46, %v693
    %v695 = vand.u32 %v694, 4294901760
    %v696 = vsub.f32 %v694, %v695
    %v697 = vand.u32 %v696, 4294901760
    %698 = vmatpush.msra.mxu0 %v697
    %v699 = vand.u32 %v77, 4294901760
    %700 = vmatmul.f32.gmra.mxu0 %v699
    %v701 = vpop.f32.mrf.mxu0
    %v702 = vadd.f32 %v661, %v701
    %703 = vdwg.mxu0
    %704 = vmatpush.msra.mxu0 0.0
    %705 = vmatpush.msra.mxu0 0.0
    %706 = vmatpush.msra.mxu0 0.0
    %707 = vmatpush.msra.mxu0 0.0
    %708 = vmatpush.msra.mxu0 0.0
    %709 = vmatpush.msra.mxu0 0.0
    %710 = vmatpush.msra.mxu0 0.0
    %711 = vmatpush.msra.mxu0 0.0
    %712 = vmatpush.msra.mxu0 0.0
    %713 = vmatpush.msra.mxu0 0.0
    %714 = vmatpush.msra.mxu0 0.0
    %715 = vmatpush.msra.mxu0 0.0
    %v716 = vand.u32 %v70, 4294901760
    %v717 = vsub.f32 %v70, %v716
    %718 = vmatpush.msra.mxu0 %v717
    %v719 = vand.u32 %v62, 4294901760
    %v720 = vsub.f32 %v62, %v719
    %721 = vmatpush.msra.mxu0 %v720
    %v722 = vand.u32 %v54, 4294901760
    %v723 = vsub.f32 %v54, %v722
    %724 = vmatpush.msra.mxu0 %v723
    %v725 = vand.u32 %v46, 4294901760
    %v726 = vsub.f32 %v46, %v725
    %727 = vmatpush.msra.mxu0 %v726
    %v728 = vand.u32 %v77, 4294901760
    %v729 = vsub.f32 %v77, %v728
    %730 = vmatmul.f32.gmra.mxu0 %v729
    %v731 = vpop.f32.mrf.mxu0
    %v732 = vadd.f32 %v702, %v731
    %733 = vdwg.mxu0
    %734 = vmatpush.msra.mxu0 0.0
    %735 = vmatpush.msra.mxu0 0.0
    %736 = vmatpush.msra.mxu0 0.0
    %737 = vmatpush.msra.mxu0 0.0
    %738 = vmatpush.msra.mxu0 0.0
    %739 = vmatpush.msra.mxu0 0.0
    %740 = vmatpush.msra.mxu0 0.0
    %741 = vmatpush.msra.mxu0 0.0
    %742 = vmatpush.msra.mxu0 0.0
    %743 = vmatpush.msra.mxu0 0.0
    %744 = vmatpush.msra.mxu0 0.0
    %745 = vmatpush.msra.mxu0 0.0
    %v746 = vand.u32 %v70, 4294901760
    %747 = vmatpush.msra.mxu0 %v746
    %v748 = vand.u32 %v62, 4294901760
    %749 = vmatpush.msra.mxu0 %v748
    %v750 = vand.u32 %v54, 4294901760
    %751 = vmatpush.msra.mxu0 %v750
    %v752 = vand.u32 %v46, 4294901760
    %753 = vmatpush.msra.mxu0 %v752
    %v754 = vand.u32 %v77, 4294901760
    %v755 = vsub.f32 %v77, %v754
    %v756 = vand.u32 %v755, 4294901760
    %757 = vmatmul.f32.gmra.mxu0 %v756
    %v758 = vpop.f32.mrf.mxu0
    %v759 = vadd.f32 %v732, %v758
    %760 = vdwg.mxu0
    %761 = vmatpush.msra.mxu0 0.0
    %762 = vmatpush.msra.mxu0 0.0
    %763 = vmatpush.msra.mxu0 0.0
    %764 = vmatpush.msra.mxu0 0.0
    %765 = vmatpush.msra.mxu0 0.0
    %766 = vmatpush.msra.mxu0 0.0
    %767 = vmatpush.msra.mxu0 0.0
    %768 = vmatpush.msra.mxu0 0.0
    %769 = vmatpush.msra.mxu0 0.0
    %770 = vmatpush.msra.mxu0 0.0
    %771 = vmatpush.msra.mxu0 0.0
    %772 = vmatpush.msra.mxu0 0.0
    %v773 = vand.u32 %v70, 4294901760
    %v774 = vsub.f32 %v70, %v773
    %v775 = vand.u32 %v774, 4294901760
    %776 = vmatpush.msra.mxu0 %v775
    %v777 = vand.u32 %v62, 4294901760
    %v778 = vsub.f32 %v62, %v777
    %v779 = vand.u32 %v778, 4294901760
    %780 = vmatpush.msra.mxu0 %v779
    %v781 = vand.u32 %v54, 4294901760
    %v782 = vsub.f32 %v54, %v781
    %v783 = vand.u32 %v782, 4294901760
    %784 = vmatpush.msra.mxu0 %v783
    %v785 = vand.u32 %v46, 4294901760
    %v786 = vsub.f32 %v46, %v785
    %v787 = vand.u32 %v786, 4294901760
    %788 = vmatpush.msra.mxu0 %v787
    %v789 = vand.u32 %v77, 4294901760
    %790 = vmatmul.f32.gmra.mxu0 %v789
    %v791 = vpop.f32.mrf.mxu0
    %v792 = vadd.f32 %v759, %v791
    %793 = vdwg.mxu0
    %794 = vmatpush.msra.mxu0 0.0
    %795 = vmatpush.msra.mxu0 0.0
    %796 = vmatpush.msra.mxu0 0.0
    %797 = vmatpush.msra.mxu0 0.0
    %798 = vmatpush.msra.mxu0 0.0
    %799 = vmatpush.msra.mxu0 0.0
    %800 = vmatpush.msra.mxu0 0.0
    %801 = vmatpush.msra.mxu0 0.0
    %802 = vmatpush.msra.mxu0 0.0
    %803 = vmatpush.msra.mxu0 0.0
    %804 = vmatpush.msra.mxu0 0.0
    %805 = vmatpush.msra.mxu0 0.0
    %v806 = vand.u32 %v70, 4294901760
    %807 = vmatpush.msra.mxu0 %v806
    %v808 = vand.u32 %v62, 4294901760
    %809 = vmatpush.msra.mxu0 %v808
    %v810 = vand.u32 %v54, 4294901760
    %811 = vmatpush.msra.mxu0 %v810
    %v812 = vand.u32 %v46, 4294901760
    %813 = vmatpush.msra.mxu0 %v812
    %v814 = vand.u32 %v77, 4294901760
    %815 = vmatmul.f32.gmra.mxu0 %v814
    %v816 = vpop.f32.mrf.mxu0
    %v817 = vadd.f32 %v792, %v816
    %818 = vdwg.mxu0
    %819 = vmatpush.msra.mxu0 0.0
    %820 = vmatpush.msra.mxu0 0.0
    %821 = vmatpush.msra.mxu0 0.0
    %822 = vmatpush.msra.mxu0 0.0
    %823 = vmatpush.msra.mxu0 0.0
    %824 = vmatpush.msra.mxu0 0.0
    %825 = vmatpush.msra.mxu0 0.0
    %826 = vmatpush.msra.mxu0 0.0
    %827 = vmatpush.msra.mxu0 0.0
    %828 = vmatpush.msra.mxu0 0.0
    %829 = vmatpush.msra.mxu0 0.0
    %830 = vmatpush.msra.mxu0 0.0
    %v831 = vand.u32 %v71, 4294901760
    %832 = vmatpush.msra.mxu0 %v831
    %v833 = vand.u32 %v63, 4294901760
    %834 = vmatpush.msra.mxu0 %v833
    %v835 = vand.u32 %v55, 4294901760
    %836 = vmatpush.msra.mxu0 %v835
    %v837 = vand.u32 %v47, 4294901760
    %838 = vmatpush.msra.mxu0 %v837
    %v839 = vand.u32 %v77, 4294901760
    %v840 = vsub.f32 %v77, %v839
    %v841 = vand.u32 %v840, 4294901760
    %v842 = vsub.f32 %v840, %v841
    %v843 = vand.u32 %v842, 4294901760
    %844 = vmatmul.f32.gmra.mxu0 %v843
    %v845 = vpop.f32.mrf.mxu0
    %v846 = vadd.f32 0.0, %v845
    %847 = vdwg.mxu0
    %848 = vmatpush.msra.mxu0 0.0
    %849 = vmatpush.msra.mxu0 0.0
    %850 = vmatpush.msra.mxu0 0.0
    %851 = vmatpush.msra.mxu0 0.0
    %852 = vmatpush.msra.mxu0 0.0
    %853 = vmatpush.msra.mxu0 0.0
    %854 = vmatpush.msra.mxu0 0.0
    %855 = vmatpush.msra.mxu0 0.0
    %856 = vmatpush.msra.mxu0 0.0
    %857 = vmatpush.msra.mxu0 0.0
    %858 = vmatpush.msra.mxu0 0.0
    %859 = vmatpush.msra.mxu0 0.0
    %v860 = vand.u32 %v71, 4294901760
    %v861 = vsub.f32 %v71, %v860
    %v862 = vand.u32 %v861, 4294901760
    %v863 = vsub.f32 %v861, %v862
    %v864 = vand.u32 %v863, 4294901760
    %865 = vmatpush.msra.mxu0 %v864
    %v866 = vand.u32 %v63, 4294901760
    %v867 = vsub.f32 %v63, %v866
    %v868 = vand.u32 %v867, 4294901760
    %v869 = vsub.f32 %v867, %v868
    %v870 = vand.u32 %v869, 4294901760
    %871 = vmatpush.msra.mxu0 %v870
    %v872 = vand.u32 %v55, 4294901760
    %v873 = vsub.f32 %v55, %v872
    %v874 = vand.u32 %v873, 4294901760
    %v875 = vsub.f32 %v873, %v874
    %v876 = vand.u32 %v875, 4294901760
    %877 = vmatpush.msra.mxu0 %v876
    %v878 = vand.u32 %v47, 4294901760
    %v879 = vsub.f32 %v47, %v878
    %v880 = vand.u32 %v879, 4294901760
    %v881 = vsub.f32 %v879, %v880
    %v882 = vand.u32 %v881, 4294901760
    %883 = vmatpush.msra.mxu0 %v882
    %v884 = vand.u32 %v77, 4294901760
    %885 = vmatmul.f32.gmra.mxu0 %v884
    %v886 = vpop.f32.mrf.mxu0
    %v887 = vadd.f32 %v846, %v886
    %888 = vdwg.mxu0
    %889 = vmatpush.msra.mxu0 0.0
    %890 = vmatpush.msra.mxu0 0.0
    %891 = vmatpush.msra.mxu0 0.0
    %892 = vmatpush.msra.mxu0 0.0
    %893 = vmatpush.msra.mxu0 0.0
    %894 = vmatpush.msra.mxu0 0.0
    %895 = vmatpush.msra.mxu0 0.0
    %896 = vmatpush.msra.mxu0 0.0
    %897 = vmatpush.msra.mxu0 0.0
    %898 = vmatpush.msra.mxu0 0.0
    %899 = vmatpush.msra.mxu0 0.0
    %900 = vmatpush.msra.mxu0 0.0
    %v901 = vand.u32 %v71, 4294901760
    %v902 = vsub.f32 %v71, %v901
    %903 = vmatpush.msra.mxu0 %v902
    %v904 = vand.u32 %v63, 4294901760
    %v905 = vsub.f32 %v63, %v904
    %906 = vmatpush.msra.mxu0 %v905
    %v907 = vand.u32 %v55, 4294901760
    %v908 = vsub.f32 %v55, %v907
    %909 = vmatpush.msra.mxu0 %v908
    %v910 = vand.u32 %v47, 4294901760
    %v911 = vsub.f32 %v47, %v910
    %912 = vmatpush.msra.mxu0 %v911
    %v913 = vand.u32 %v77, 4294901760
    %v914 = vsub.f32 %v77, %v913
    %915 = vmatmul.f32.gmra.mxu0 %v914
    %v916 = vpop.f32.mrf.mxu0
    %v917 = vadd.f32 %v887, %v916
    %918 = vdwg.mxu0
    %919 = vmatpush.msra.mxu0 0.0
    %920 = vmatpush.msra.mxu0 0.0
    %921 = vmatpush.msra.mxu0 0.0
    %922 = vmatpush.msra.mxu0 0.0
    %923 = vmatpush.msra.mxu0 0.0
    %924 = vmatpush.msra.mxu0 0.0
    %925 = vmatpush.msra.mxu0 0.0
    %926 = vmatpush.msra.mxu0 0.0
    %927 = vmatpush.msra.mxu0 0.0
    %928 = vmatpush.msra.mxu0 0.0
    %929 = vmatpush.msra.mxu0 0.0
    %930 = vmatpush.msra.mxu0 0.0
    %v931 = vand.u32 %v71, 4294901760
    %932 = vmatpush.msra.mxu0 %v931
    %v933 = vand.u32 %v63, 4294901760
    %934 = vmatpush.msra.mxu0 %v933
    %v935 = vand.u32 %v55, 4294901760
    %936 = vmatpush.msra.mxu0 %v935
    %v937 = vand.u32 %v47, 4294901760
    %938 = vmatpush.msra.mxu0 %v937
    %v939 = vand.u32 %v77, 4294901760
    %v940 = vsub.f32 %v77, %v939
    %v941 = vand.u32 %v940, 4294901760
    %942 = vmatmul.f32.gmra.mxu0 %v941
    %v943 = vpop.f32.mrf.mxu0
    %v944 = vadd.f32 %v917, %v943
    %945 = vdwg.mxu0
    %946 = vmatpush.msra.mxu0 0.0
    %947 = vmatpush.msra.mxu0 0.0
    %948 = vmatpush.msra.mxu0 0.0
    %949 = vmatpush.msra.mxu0 0.0
    %950 = vmatpush.msra.mxu0 0.0
    %951 = vmatpush.msra.mxu0 0.0
    %952 = vmatpush.msra.mxu0 0.0
    %953 = vmatpush.msra.mxu0 0.0
    %954 = vmatpush.msra.mxu0 0.0
    %955 = vmatpush.msra.mxu0 0.0
    %956 = vmatpush.msra.mxu0 0.0
    %957 = vmatpush.msra.mxu0 0.0
    %v958 = vand.u32 %v71, 4294901760
    %v959 = vsub.f32 %v71, %v958
    %v960 = vand.u32 %v959, 4294901760
    %961 = vmatpush.msra.mxu0 %v960
    %v962 = vand.u32 %v63, 4294901760
    %v963 = vsub.f32 %v63, %v962
    %v964 = vand.u32 %v963, 4294901760
    %965 = vmatpush.msra.mxu0 %v964
    %v966 = vand.u32 %v55, 4294901760
    %v967 = vsub.f32 %v55, %v966
    %v968 = vand.u32 %v967, 4294901760
    %969 = vmatpush.msra.mxu0 %v968
    %v970 = vand.u32 %v47, 4294901760
    %v971 = vsub.f32 %v47, %v970
    %v972 = vand.u32 %v971, 4294901760
    %973 = vmatpush.msra.mxu0 %v972
    %v974 = vand.u32 %v77, 4294901760
    %975 = vmatmul.f32.gmra.mxu0 %v974
    %v976 = vpop.f32.mrf.mxu0
    %v977 = vadd.f32 %v944, %v976
    %978 = vdwg.mxu0
    %979 = vmatpush.msra.mxu0 0.0
    %980 = vmatpush.msra.mxu0 0.0
    %981 = vmatpush.msra.mxu0 0.0
    %982 = vmatpush.msra.mxu0 0.0
    %983 = vmatpush.msra.mxu0 0.0
    %984 = vmatpush.msra.mxu0 0.0
    %985 = vmatpush.msra.mxu0 0.0
    %986 = vmatpush.msra.mxu0 0.0
    %987 = vmatpush.msra.mxu0 0.0
    %988 = vmatpush.msra.mxu0 0.0
    %989 = vmatpush.msra.mxu0 0.0
    %990 = vmatpush.msra.mxu0 0.0
    %v991 = vand.u32 %v71, 4294901760
    %992 = vmatpush.msra.mxu0 %v991
    %v993 = vand.u32 %v63, 4294901760
    %994 = vmatpush.msra.mxu0 %v993
    %v995 = vand.u32 %v55, 4294901760
    %996 = vmatpush.msra.mxu0 %v995
    %v997 = vand.u32 %v47, 4294901760
    %998 = vmatpush.msra.mxu0 %v997
    %v999 = vand.u32 %v77, 4294901760
    %1000 = vmatmul.f32.gmra.mxu0 %v999
    %v1001 = vpop.f32.mrf.mxu0
    %v1002 = vadd.f32 %v977, %v1001
    %1003 = vdwg.mxu0
    %1004 = vmatpush.msra.mxu0 0.0
    %1005 = vmatpush.msra.mxu0 0.0
    %1006 = vmatpush.msra.mxu0 0.0
    %1007 = vmatpush.msra.mxu0 0.0
    %1008 = vmatpush.msra.mxu0 0.0
    %1009 = vmatpush.msra.mxu0 0.0
    %1010 = vmatpush.msra.mxu0 0.0
    %1011 = vmatpush.msra.mxu0 0.0
    %1012 = vmatpush.msra.mxu0 0.0
    %1013 = vmatpush.msra.mxu0 0.0
    %1014 = vmatpush.msra.mxu0 0.0
    %1015 = vmatpush.msra.mxu0 0.0
    %v1016 = vand.u32 %v72, 4294901760
    %1017 = vmatpush.msra.mxu0 %v1016
    %v1018 = vand.u32 %v64, 4294901760
    %1019 = vmatpush.msra.mxu0 %v1018
    %v1020 = vand.u32 %v56, 4294901760
    %1021 = vmatpush.msra.mxu0 %v1020
    %v1022 = vand.u32 %v48, 4294901760
    %1023 = vmatpush.msra.mxu0 %v1022
    %v1024 = vand.u32 %v77, 4294901760
    %v1025 = vsub.f32 %v77, %v1024
    %v1026 = vand.u32 %v1025, 4294901760
    %v1027 = vsub.f32 %v1025, %v1026
    %v1028 = vand.u32 %v1027, 4294901760
    %1029 = vmatmul.f32.gmra.mxu0 %v1028
    %v1030 = vpop.f32.mrf.mxu0
    %v1031 = vadd.f32 0.0, %v1030
    %1032 = vdwg.mxu0
    %1033 = vmatpush.msra.mxu0 0.0
    %1034 = vmatpush.msra.mxu0 0.0
    %1035 = vmatpush.msra.mxu0 0.0
    %1036 = vmatpush.msra.mxu0 0.0
    %1037 = vmatpush.msra.mxu0 0.0
    %1038 = vmatpush.msra.mxu0 0.0
    %1039 = vmatpush.msra.mxu0 0.0
    %1040 = vmatpush.msra.mxu0 0.0
    %1041 = vmatpush.msra.mxu0 0.0
    %1042 = vmatpush.msra.mxu0 0.0
    %1043 = vmatpush.msra.mxu0 0.0
    %1044 = vmatpush.msra.mxu0 0.0
    %v1045 = vand.u32 %v72, 4294901760
    %v1046 = vsub.f32 %v72, %v1045
    %v1047 = vand.u32 %v1046, 4294901760
    %v1048 = vsub.f32 %v1046, %v1047
    %v1049 = vand.u32 %v1048, 4294901760
    %1050 = vmatpush.msra.mxu0 %v1049
    %v1051 = vand.u32 %v64, 4294901760
    %v1052 = vsub.f32 %v64, %v1051
    %v1053 = vand.u32 %v1052, 4294901760
    %v1054 = vsub.f32 %v1052, %v1053
    %v1055 = vand.u32 %v1054, 4294901760
    %1056 = vmatpush.msra.mxu0 %v1055
    %v1057 = vand.u32 %v56, 4294901760
    %v1058 = vsub.f32 %v56, %v1057
    %v1059 = vand.u32 %v1058, 4294901760
    %v1060 = vsub.f32 %v1058, %v1059
    %v1061 = vand.u32 %v1060, 4294901760
    %1062 = vmatpush.msra.mxu0 %v1061
    %v1063 = vand.u32 %v48, 4294901760
    %v1064 = vsub.f32 %v48, %v1063
    %v1065 = vand.u32 %v1064, 4294901760
    %v1066 = vsub.f32 %v1064, %v1065
    %v1067 = vand.u32 %v1066, 4294901760
    %1068 = vmatpush.msra.mxu0 %v1067
    %v1069 = vand.u32 %v77, 4294901760
    %1070 = vmatmul.f32.gmra.mxu0 %v1069
    %v1071 = vpop.f32.mrf.mxu0
    %v1072 = vadd.f32 %v1031, %v1071
    %1073 = vdwg.mxu0
    %1074 = vmatpush.msra.mxu0 0.0
    %1075 = vmatpush.msra.mxu0 0.0
    %1076 = vmatpush.msra.mxu0 0.0
    %1077 = vmatpush.msra.mxu0 0.0
    %1078 = vmatpush.msra.mxu0 0.0
    %1079 = vmatpush.msra.mxu0 0.0
    %1080 = vmatpush.msra.mxu0 0.0
    %1081 = vmatpush.msra.mxu0 0.0
    %1082 = vmatpush.msra.mxu0 0.0
    %1083 = vmatpush.msra.mxu0 0.0
    %1084 = vmatpush.msra.mxu0 0.0
    %1085 = vmatpush.msra.mxu0 0.0
    %v1086 = vand.u32 %v72, 4294901760
    %v1087 = vsub.f32 %v72, %v1086
    %1088 = vmatpush.msra.mxu0 %v1087
    %v1089 = vand.u32 %v64, 4294901760
    %v1090 = vsub.f32 %v64, %v1089
    %1091 = vmatpush.msra.mxu0 %v1090
    %v1092 = vand.u32 %v56, 4294901760
    %v1093 = vsub.f32 %v56, %v1092
    %1094 = vmatpush.msra.mxu0 %v1093
    %v1095 = vand.u32 %v48, 4294901760
    %v1096 = vsub.f32 %v48, %v1095
    %1097 = vmatpush.msra.mxu0 %v1096
    %v1098 = vand.u32 %v77, 4294901760
    %v1099 = vsub.f32 %v77, %v1098
    %1100 = vmatmul.f32.gmra.mxu0 %v1099
    %v1101 = vpop.f32.mrf.mxu0
    %v1102 = vadd.f32 %v1072, %v1101
    %1103 = vdwg.mxu0
    %1104 = vmatpush.msra.mxu0 0.0
    %1105 = vmatpush.msra.mxu0 0.0
    %1106 = vmatpush.msra.mxu0 0.0
    %1107 = vmatpush.msra.mxu0 0.0
    %1108 = vmatpush.msra.mxu0 0.0
    %1109 = vmatpush.msra.mxu0 0.0
    %1110 = vmatpush.msra.mxu0 0.0
    %1111 = vmatpush.msra.mxu0 0.0
    %1112 = vmatpush.msra.mxu0 0.0
    %1113 = vmatpush.msra.mxu0 0.0
    %1114 = vmatpush.msra.mxu0 0.0
    %1115 = vmatpush.msra.mxu0 0.0
    %v1116 = vand.u32 %v72, 4294901760
    %1117 = vmatpush.msra.mxu0 %v1116
    %v1118 = vand.u32 %v64, 4294901760
    %1119 = vmatpush.msra.mxu0 %v1118
    %v1120 = vand.u32 %v56, 4294901760
    %1121 = vmatpush.msra.mxu0 %v1120
    %v1122 = vand.u32 %v48, 4294901760
    %1123 = vmatpush.msra.mxu0 %v1122
    %v1124 = vand.u32 %v77, 4294901760
    %v1125 = vsub.f32 %v77, %v1124
    %v1126 = vand.u32 %v1125, 4294901760
    %1127 = vmatmul.f32.gmra.mxu0 %v1126
    %v1128 = vpop.f32.mrf.mxu0
    %v1129 = vadd.f32 %v1102, %v1128
    %1130 = vdwg.mxu0
    %1131 = vmatpush.msra.mxu0 0.0
    %1132 = vmatpush.msra.mxu0 0.0
    %1133 = vmatpush.msra.mxu0 0.0
    %1134 = vmatpush.msra.mxu0 0.0
    %1135 = vmatpush.msra.mxu0 0.0
    %1136 = vmatpush.msra.mxu0 0.0
    %1137 = vmatpush.msra.mxu0 0.0
    %1138 = vmatpush.msra.mxu0 0.0
    %1139 = vmatpush.msra.mxu0 0.0
    %1140 = vmatpush.msra.mxu0 0.0
    %1141 = vmatpush.msra.mxu0 0.0
    %1142 = vmatpush.msra.mxu0 0.0
    %v1143 = vand.u32 %v72, 4294901760
    %v1144 = vsub.f32 %v72, %v1143
    %v1145 = vand.u32 %v1144, 4294901760
    %1146 = vmatpush.msra.mxu0 %v1145
    %v1147 = vand.u32 %v64, 4294901760
    %v1148 = vsub.f32 %v64, %v1147
    %v1149 = vand.u32 %v1148, 4294901760
    %1150 = vmatpush.msra.mxu0 %v1149
    %v1151 = vand.u32 %v56, 4294901760
    %v1152 = vsub.f32 %v56, %v1151
    %v1153 = vand.u32 %v1152, 4294901760
    %1154 = vmatpush.msra.mxu0 %v1153
    %v1155 = vand.u32 %v48, 4294901760
    %v1156 = vsub.f32 %v48, %v1155
    %v1157 = vand.u32 %v1156, 4294901760
    %1158 = vmatpush.msra.mxu0 %v1157
    %v1159 = vand.u32 %v77, 4294901760
    %1160 = vmatmul.f32.gmra.mxu0 %v1159
    %v1161 = vpop.f32.mrf.mxu0
    %v1162 = vadd.f32 %v1129, %v1161
    %1163 = vdwg.mxu0
    %1164 = vmatpush.msra.mxu0 0.0
    %1165 = vmatpush.msra.mxu0 0.0
    %1166 = vmatpush.msra.mxu0 0.0
    %1167 = vmatpush.msra.mxu0 0.0
    %1168 = vmatpush.msra.mxu0 0.0
    %1169 = vmatpush.msra.mxu0 0.0
    %1170 = vmatpush.msra.mxu0 0.0
    %1171 = vmatpush.msra.mxu0 0.0
    %1172 = vmatpush.msra.mxu0 0.0
    %1173 = vmatpush.msra.mxu0 0.0
    %1174 = vmatpush.msra.mxu0 0.0
    %1175 = vmatpush.msra.mxu0 0.0
    %v1176 = vand.u32 %v72, 4294901760
    %1177 = vmatpush.msra.mxu0 %v1176
    %v1178 = vand.u32 %v64, 4294901760
    %1179 = vmatpush.msra.mxu0 %v1178
    %v1180 = vand.u32 %v56, 4294901760
    %1181 = vmatpush.msra.mxu0 %v1180
    %v1182 = vand.u32 %v48, 4294901760
    %1183 = vmatpush.msra.mxu0 %v1182
    %v1184 = vand.u32 %v77, 4294901760
    %1185 = vmatmul.f32.gmra.mxu0 %v1184
    %v1186 = vpop.f32.mrf.mxu0
    %v1187 = vadd.f32 %v1162, %v1186
    %1188 = vdwg.mxu0
    %1189 = vmatpush.msra.mxu0 0.0
    %1190 = vmatpush.msra.mxu0 0.0
    %1191 = vmatpush.msra.mxu0 0.0
    %1192 = vmatpush.msra.mxu0 0.0
    %1193 = vmatpush.msra.mxu0 0.0
    %1194 = vmatpush.msra.mxu0 0.0
    %1195 = vmatpush.msra.mxu0 0.0
    %1196 = vmatpush.msra.mxu0 0.0
    %1197 = vmatpush.msra.mxu0 0.0
    %1198 = vmatpush.msra.mxu0 0.0
    %1199 = vmatpush.msra.mxu0 0.0
    %1200 = vmatpush.msra.mxu0 0.0
    %v1201 = vand.u32 %v73, 4294901760
    %1202 = vmatpush.msra.mxu0 %v1201
    %v1203 = vand.u32 %v65, 4294901760
    %1204 = vmatpush.msra.mxu0 %v1203
    %v1205 = vand.u32 %v57, 4294901760
    %1206 = vmatpush.msra.mxu0 %v1205
    %v1207 = vand.u32 %v49, 4294901760
    %1208 = vmatpush.msra.mxu0 %v1207
    %v1209 = vand.u32 %v77, 4294901760
    %v1210 = vsub.f32 %v77, %v1209
    %v1211 = vand.u32 %v1210, 4294901760
    %v1212 = vsub.f32 %v1210, %v1211
    %v1213 = vand.u32 %v1212, 4294901760
    %1214 = vmatmul.f32.gmra.mxu0 %v1213
    %v1215 = vpop.f32.mrf.mxu0
    %v1216 = vadd.f32 0.0, %v1215
    %1217 = vdwg.mxu0
    %1218 = vmatpush.msra.mxu0 0.0
    %1219 = vmatpush.msra.mxu0 0.0
    %1220 = vmatpush.msra.mxu0 0.0
    %1221 = vmatpush.msra.mxu0 0.0
    %1222 = vmatpush.msra.mxu0 0.0
    %1223 = vmatpush.msra.mxu0 0.0
    %1224 = vmatpush.msra.mxu0 0.0
    %1225 = vmatpush.msra.mxu0 0.0
    %1226 = vmatpush.msra.mxu0 0.0
    %1227 = vmatpush.msra.mxu0 0.0
    %1228 = vmatpush.msra.mxu0 0.0
    %1229 = vmatpush.msra.mxu0 0.0
    %v1230 = vand.u32 %v73, 4294901760
    %v1231 = vsub.f32 %v73, %v1230
    %v1232 = vand.u32 %v1231, 4294901760
    %v1233 = vsub.f32 %v1231, %v1232
    %v1234 = vand.u32 %v1233, 4294901760
    %1235 = vmatpush.msra.mxu0 %v1234
    %v1236 = vand.u32 %v65, 4294901760
    %v1237 = vsub.f32 %v65, %v1236
    %v1238 = vand.u32 %v1237, 4294901760
    %v1239 = vsub.f32 %v1237, %v1238
    %v1240 = vand.u32 %v1239, 4294901760
    %1241 = vmatpush.msra.mxu0 %v1240
    %v1242 = vand.u32 %v57, 4294901760
    %v1243 = vsub.f32 %v57, %v1242
    %v1244 = vand.u32 %v1243, 4294901760
    %v1245 = vsub.f32 %v1243, %v1244
    %v1246 = vand.u32 %v1245, 4294901760
    %1247 = vmatpush.msra.mxu0 %v1246
    %v1248 = vand.u32 %v49, 4294901760
    %v1249 = vsub.f32 %v49, %v1248
    %v1250 = vand.u32 %v1249, 4294901760
    %v1251 = vsub.f32 %v1249, %v1250
    %v1252 = vand.u32 %v1251, 4294901760
    %1253 = vmatpush.msra.mxu0 %v1252
    %v1254 = vand.u32 %v77, 4294901760
    %1255 = vmatmul.f32.gmra.mxu0 %v1254
    %v1256 = vpop.f32.mrf.mxu0
    %v1257 = vadd.f32 %v1216, %v1256
    %1258 = vdwg.mxu0
    %1259 = vmatpush.msra.mxu0 0.0
    %1260 = vmatpush.msra.mxu0 0.0
    %1261 = vmatpush.msra.mxu0 0.0
    %1262 = vmatpush.msra.mxu0 0.0
    %1263 = vmatpush.msra.mxu0 0.0
    %1264 = vmatpush.msra.mxu0 0.0
    %1265 = vmatpush.msra.mxu0 0.0
    %1266 = vmatpush.msra.mxu0 0.0
    %1267 = vmatpush.msra.mxu0 0.0
    %1268 = vmatpush.msra.mxu0 0.0
    %1269 = vmatpush.msra.mxu0 0.0
    %1270 = vmatpush.msra.mxu0 0.0
    %v1271 = vand.u32 %v73, 4294901760
    %v1272 = vsub.f32 %v73, %v1271
    %1273 = vmatpush.msra.mxu0 %v1272
    %v1274 = vand.u32 %v65, 4294901760
    %v1275 = vsub.f32 %v65, %v1274
    %1276 = vmatpush.msra.mxu0 %v1275
    %v1277 = vand.u32 %v57, 4294901760
    %v1278 = vsub.f32 %v57, %v1277
    %1279 = vmatpush.msra.mxu0 %v1278
    %v1280 = vand.u32 %v49, 4294901760
    %v1281 = vsub.f32 %v49, %v1280
    %1282 = vmatpush.msra.mxu0 %v1281
    %v1283 = vand.u32 %v77, 4294901760
    %v1284 = vsub.f32 %v77, %v1283
    %1285 = vmatmul.f32.gmra.mxu0 %v1284
    %v1286 = vpop.f32.mrf.mxu0
    %v1287 = vadd.f32 %v1257, %v1286
    %1288 = vdwg.mxu0
    %1289 = vmatpush.msra.mxu0 0.0
    %1290 = vmatpush.msra.mxu0 0.0
    %1291 = vmatpush.msra.mxu0 0.0
    %1292 = vmatpush.msra.mxu0 0.0
    %1293 = vmatpush.msra.mxu0 0.0
    %1294 = vmatpush.msra.mxu0 0.0
    %1295 = vmatpush.msra.mxu0 0.0
    %1296 = vmatpush.msra.mxu0 0.0
    %1297 = vmatpush.msra.mxu0 0.0
    %1298 = vmatpush.msra.mxu0 0.0
    %1299 = vmatpush.msra.mxu0 0.0
    %1300 = vmatpush.msra.mxu0 0.0
    %v1301 = vand.u32 %v73, 4294901760
    %1302 = vmatpush.msra.mxu0 %v1301
    %v1303 = vand.u32 %v65, 4294901760
    %1304 = vmatpush.msra.mxu0 %v1303
    %v1305 = vand.u32 %v57, 4294901760
    %1306 = vmatpush.msra.mxu0 %v1305
    %v1307 = vand.u32 %v49, 4294901760
    %1308 = vmatpush.msra.mxu0 %v1307
    %v1309 = vand.u32 %v77, 4294901760
    %v1310 = vsub.f32 %v77, %v1309
    %v1311 = vand.u32 %v1310, 4294901760
    %1312 = vmatmul.f32.gmra.mxu0 %v1311
    %v1313 = vpop.f32.mrf.mxu0
    %v1314 = vadd.f32 %v1287, %v1313
    %1315 = vdwg.mxu0
    %1316 = vmatpush.msra.mxu0 0.0
    %1317 = vmatpush.msra.mxu0 0.0
    %1318 = vmatpush.msra.mxu0 0.0
    %1319 = vmatpush.msra.mxu0 0.0
    %1320 = vmatpush.msra.mxu0 0.0
    %1321 = vmatpush.msra.mxu0 0.0
    %1322 = vmatpush.msra.mxu0 0.0
    %1323 = vmatpush.msra.mxu0 0.0
    %1324 = vmatpush.msra.mxu0 0.0
    %1325 = vmatpush.msra.mxu0 0.0
    %1326 = vmatpush.msra.mxu0 0.0
    %1327 = vmatpush.msra.mxu0 0.0
    %v1328 = vand.u32 %v73, 4294901760
    %v1329 = vsub.f32 %v73, %v1328
    %v1330 = vand.u32 %v1329, 4294901760
    %1331 = vmatpush.msra.mxu0 %v1330
    %v1332 = vand.u32 %v65, 4294901760
    %v1333 = vsub.f32 %v65, %v1332
    %v1334 = vand.u32 %v1333, 4294901760
    %1335 = vmatpush.msra.mxu0 %v1334
    %v1336 = vand.u32 %v57, 4294901760
    %v1337 = vsub.f32 %v57, %v1336
    %v1338 = vand.u32 %v1337, 4294901760
    %1339 = vmatpush.msra.mxu0 %v1338
    %v1340 = vand.u32 %v49, 4294901760
    %v1341 = vsub.f32 %v49, %v1340
    %v1342 = vand.u32 %v1341, 4294901760
    %1343 = vmatpush.msra.mxu0 %v1342
    %v1344 = vand.u32 %v77, 4294901760
    %1345 = vmatmul.f32.gmra.mxu0 %v1344
    %v1346 = vpop.f32.mrf.mxu0
    %v1347 = vadd.f32 %v1314, %v1346
    %1348 = vdwg.mxu0
    %1349 = vmatpush.msra.mxu0 0.0
    %1350 = vmatpush.msra.mxu0 0.0
    %1351 = vmatpush.msra.mxu0 0.0
    %1352 = vmatpush.msra.mxu0 0.0
    %1353 = vmatpush.msra.mxu0 0.0
    %1354 = vmatpush.msra.mxu0 0.0
    %1355 = vmatpush.msra.mxu0 0.0
    %1356 = vmatpush.msra.mxu0 0.0
    %1357 = vmatpush.msra.mxu0 0.0
    %1358 = vmatpush.msra.mxu0 0.0
    %1359 = vmatpush.msra.mxu0 0.0
    %1360 = vmatpush.msra.mxu0 0.0
    %v1361 = vand.u32 %v73, 4294901760
    %1362 = vmatpush.msra.mxu0 %v1361
    %v1363 = vand.u32 %v65, 4294901760
    %1364 = vmatpush.msra.mxu0 %v1363
    %v1365 = vand.u32 %v57, 4294901760
    %1366 = vmatpush.msra.mxu0 %v1365
    %v1367 = vand.u32 %v49, 4294901760
    %1368 = vmatpush.msra.mxu0 %v1367
    %v1369 = vand.u32 %v77, 4294901760
    %1370 = vmatmul.f32.gmra.mxu0 %v1369
    %v1371 = vpop.f32.mrf.mxu0
    %v1372 = vadd.f32 %v1347, %v1371
    %1373 = vdwg.mxu0
    %1374 = vmatpush.msra.mxu0 0.0
    %1375 = vmatpush.msra.mxu0 0.0
    %1376 = vmatpush.msra.mxu0 0.0
    %1377 = vmatpush.msra.mxu0 0.0
    %1378 = vmatpush.msra.mxu0 0.0
    %1379 = vmatpush.msra.mxu0 0.0
    %1380 = vmatpush.msra.mxu0 0.0
    %1381 = vmatpush.msra.mxu0 0.0
    %1382 = vmatpush.msra.mxu0 0.0
    %1383 = vmatpush.msra.mxu0 0.0
    %1384 = vmatpush.msra.mxu0 0.0
    %1385 = vmatpush.msra.mxu0 0.0
    %v1386 = vand.u32 %v74, 4294901760
    %1387 = vmatpush.msra.mxu0 %v1386
    %v1388 = vand.u32 %v66, 4294901760
    %1389 = vmatpush.msra.mxu0 %v1388
    %v1390 = vand.u32 %v58, 4294901760
    %1391 = vmatpush.msra.mxu0 %v1390
    %v1392 = vand.u32 %v50, 4294901760
    %1393 = vmatpush.msra.mxu0 %v1392
    %v1394 = vand.u32 %v77, 4294901760
    %v1395 = vsub.f32 %v77, %v1394
    %v1396 = vand.u32 %v1395, 4294901760
    %v1397 = vsub.f32 %v1395, %v1396
    %v1398 = vand.u32 %v1397, 4294901760
    %1399 = vmatmul.f32.gmra.mxu0 %v1398
    %v1400 = vpop.f32.mrf.mxu0
    %v1401 = vadd.f32 0.0, %v1400
    %1402 = vdwg.mxu0
    %1403 = vmatpush.msra.mxu0 0.0
    %1404 = vmatpush.msra.mxu0 0.0
    %1405 = vmatpush.msra.mxu0 0.0
    %1406 = vmatpush.msra.mxu0 0.0
    %1407 = vmatpush.msra.mxu0 0.0
    %1408 = vmatpush.msra.mxu0 0.0
    %1409 = vmatpush.msra.mxu0 0.0
    %1410 = vmatpush.msra.mxu0 0.0
    %1411 = vmatpush.msra.mxu0 0.0
    %1412 = vmatpush.msra.mxu0 0.0
    %1413 = vmatpush.msra.mxu0 0.0
    %1414 = vmatpush.msra.mxu0 0.0
    %v1415 = vand.u32 %v74, 4294901760
    %v1416 = vsub.f32 %v74, %v1415
    %v1417 = vand.u32 %v1416, 4294901760
    %v1418 = vsub.f32 %v1416, %v1417
    %v1419 = vand.u32 %v1418, 4294901760
    %1420 = vmatpush.msra.mxu0 %v1419
    %v1421 = vand.u32 %v66, 4294901760
    %v1422 = vsub.f32 %v66, %v1421
    %v1423 = vand.u32 %v1422, 4294901760
    %v1424 = vsub.f32 %v1422, %v1423
    %v1425 = vand.u32 %v1424, 4294901760
    %1426 = vmatpush.msra.mxu0 %v1425
    %v1427 = vand.u32 %v58, 4294901760
    %v1428 = vsub.f32 %v58, %v1427
    %v1429 = vand.u32 %v1428, 4294901760
    %v1430 = vsub.f32 %v1428, %v1429
    %v1431 = vand.u32 %v1430, 4294901760
    %1432 = vmatpush.msra.mxu0 %v1431
    %v1433 = vand.u32 %v50, 4294901760
    %v1434 = vsub.f32 %v50, %v1433
    %v1435 = vand.u32 %v1434, 4294901760
    %v1436 = vsub.f32 %v1434, %v1435
    %v1437 = vand.u32 %v1436, 4294901760
    %1438 = vmatpush.msra.mxu0 %v1437
    %v1439 = vand.u32 %v77, 4294901760
    %1440 = vmatmul.f32.gmra.mxu0 %v1439
    %v1441 = vpop.f32.mrf.mxu0
    %v1442 = vadd.f32 %v1401, %v1441
    %1443 = vdwg.mxu0
    %1444 = vmatpush.msra.mxu0 0.0
    %1445 = vmatpush.msra.mxu0 0.0
    %1446 = vmatpush.msra.mxu0 0.0
    %1447 = vmatpush.msra.mxu0 0.0
    %1448 = vmatpush.msra.mxu0 0.0
    %1449 = vmatpush.msra.mxu0 0.0
    %1450 = vmatpush.msra.mxu0 0.0
    %1451 = vmatpush.msra.mxu0 0.0
    %1452 = vmatpush.msra.mxu0 0.0
    %1453 = vmatpush.msra.mxu0 0.0
    %1454 = vmatpush.msra.mxu0 0.0
    %1455 = vmatpush.msra.mxu0 0.0
    %v1456 = vand.u32 %v74, 4294901760
    %v1457 = vsub.f32 %v74, %v1456
    %1458 = vmatpush.msra.mxu0 %v1457
    %v1459 = vand.u32 %v66, 4294901760
    %v1460 = vsub.f32 %v66, %v1459
    %1461 = vmatpush.msra.mxu0 %v1460
    %v1462 = vand.u32 %v58, 4294901760
    %v1463 = vsub.f32 %v58, %v1462
    %1464 = vmatpush.msra.mxu0 %v1463
    %v1465 = vand.u32 %v50, 4294901760
    %v1466 = vsub.f32 %v50, %v1465
    %1467 = vmatpush.msra.mxu0 %v1466
    %v1468 = vand.u32 %v77, 4294901760
    %v1469 = vsub.f32 %v77, %v1468
    %1470 = vmatmul.f32.gmra.mxu0 %v1469
    %v1471 = vpop.f32.mrf.mxu0
    %v1472 = vadd.f32 %v1442, %v1471
    %1473 = vdwg.mxu0
    %1474 = vmatpush.msra.mxu0 0.0
    %1475 = vmatpush.msra.mxu0 0.0
    %1476 = vmatpush.msra.mxu0 0.0
    %1477 = vmatpush.msra.mxu0 0.0
    %1478 = vmatpush.msra.mxu0 0.0
    %1479 = vmatpush.msra.mxu0 0.0
    %1480 = vmatpush.msra.mxu0 0.0
    %1481 = vmatpush.msra.mxu0 0.0
    %1482 = vmatpush.msra.mxu0 0.0
    %1483 = vmatpush.msra.mxu0 0.0
    %1484 = vmatpush.msra.mxu0 0.0
    %1485 = vmatpush.msra.mxu0 0.0
    %v1486 = vand.u32 %v74, 4294901760
    %1487 = vmatpush.msra.mxu0 %v1486
    %v1488 = vand.u32 %v66, 4294901760
    %1489 = vmatpush.msra.mxu0 %v1488
    %v1490 = vand.u32 %v58, 4294901760
    %1491 = vmatpush.msra.mxu0 %v1490
    %v1492 = vand.u32 %v50, 4294901760
    %1493 = vmatpush.msra.mxu0 %v1492
    %v1494 = vand.u32 %v77, 4294901760
    %v1495 = vsub.f32 %v77, %v1494
    %v1496 = vand.u32 %v1495, 4294901760
    %1497 = vmatmul.f32.gmra.mxu0 %v1496
    %v1498 = vpop.f32.mrf.mxu0
    %v1499 = vadd.f32 %v1472, %v1498
    %1500 = vdwg.mxu0
    %1501 = vmatpush.msra.mxu0 0.0
    %1502 = vmatpush.msra.mxu0 0.0
    %1503 = vmatpush.msra.mxu0 0.0
    %1504 = vmatpush.msra.mxu0 0.0
    %1505 = vmatpush.msra.mxu0 0.0
    %1506 = vmatpush.msra.mxu0 0.0
    %1507 = vmatpush.msra.mxu0 0.0
    %1508 = vmatpush.msra.mxu0 0.0
    %1509 = vmatpush.msra.mxu0 0.0
    %1510 = vmatpush.msra.mxu0 0.0
    %1511 = vmatpush.msra.mxu0 0.0
    %1512 = vmatpush.msra.mxu0 0.0
    %v1513 = vand.u32 %v74, 4294901760
    %v1514 = vsub.f32 %v74, %v1513
    %v1515 = vand.u32 %v1514, 4294901760
    %1516 = vmatpush.msra.mxu0 %v1515
    %v1517 = vand.u32 %v66, 4294901760
    %v1518 = vsub.f32 %v66, %v1517
    %v1519 = vand.u32 %v1518, 4294901760
    %1520 = vmatpush.msra.mxu0 %v1519
    %v1521 = vand.u32 %v58, 4294901760
    %v1522 = vsub.f32 %v58, %v1521
    %v1523 = vand.u32 %v1522, 4294901760
    %1524 = vmatpush.msra.mxu0 %v1523
    %v1525 = vand.u32 %v50, 4294901760
    %v1526 = vsub.f32 %v50, %v1525
    %v1527 = vand.u32 %v1526, 4294901760
    %1528 = vmatpush.msra.mxu0 %v1527
    %v1529 = vand.u32 %v77, 4294901760
    %1530 = vmatmul.f32.gmra.mxu0 %v1529
    %v1531 = vpop.f32.mrf.mxu0
    %v1532 = vadd.f32 %v1499, %v1531
    %1533 = vdwg.mxu0
    %1534 = vmatpush.msra.mxu0 0.0
    %1535 = vmatpush.msra.mxu0 0.0
    %1536 = vmatpush.msra.mxu0 0.0
    %1537 = vmatpush.msra.mxu0 0.0
    %1538 = vmatpush.msra.mxu0 0.0
    %1539 = vmatpush.msra.mxu0 0.0
    %1540 = vmatpush.msra.mxu0 0.0
    %1541 = vmatpush.msra.mxu0 0.0
    %1542 = vmatpush.msra.mxu0 0.0
    %1543 = vmatpush.msra.mxu0 0.0
    %1544 = vmatpush.msra.mxu0 0.0
    %1545 = vmatpush.msra.mxu0 0.0
    %v1546 = vand.u32 %v74, 4294901760
    %1547 = vmatpush.msra.mxu0 %v1546
    %v1548 = vand.u32 %v66, 4294901760
    %1549 = vmatpush.msra.mxu0 %v1548
    %v1550 = vand.u32 %v58, 4294901760
    %1551 = vmatpush.msra.mxu0 %v1550
    %v1552 = vand.u32 %v50, 4294901760
    %1553 = vmatpush.msra.mxu0 %v1552
    %v1554 = vand.u32 %v77, 4294901760
    %1555 = vmatmul.f32.gmra.mxu0 %v1554
    %v1556 = vpop.f32.mrf.mxu0
    %v1557 = vadd.f32 %v1532, %v1556
    %1558 = vdwg.mxu0
    %v1559 = vmin.f32 %v262, %v447
    %v1560 = vmin.f32 %v1559, %v632
    %v1561 = vmin.f32 %v1560, %v817
    %v1562 = vmin.f32 %v1561, %v1002
    %v1563 = vmin.f32 %v1562, %v1187
    %v1564 = vmin.f32 %v1563, %v1372
    %v1565 = vmin.f32 %v1564, %v1557
    %1566 = vst [vmem:[#allocation7] sm:$0xff] %v1565
    // Predicated region
    $region18: #{tpu_custom_call.1} parent=1 // pred_check
      _
    $region19: #{tpu_custom_call.1} parent=1 // pred_check_branch
      %1568 = sbr.rel (0) target = $region21
    $region20: #{tpu_custom_call.1} parent=1 // pred_region
      %1570 = vsyncadd [#allocation4], 0
      %s1572 = sshll.u32 [#allocation7], 4
      %s1573 = int_to_ptr.vmem [resolvable:$true] %s1572
      %s1574 = sshll.u32 %s2, 4
      %s1575 = int_to_ptr.hbm [resolvable:$true] %s1574
      %1577 = dma.vmem_to_hbm [thread:$0]  %s1573, 128, %s1575, [#allocation4]
    $region21: #{tpu_custom_call.1} parent=1 // pred_fallthru
      _
    // Predicated region
    $region22: #{tpu_custom_call.1} parent=1 // pred_check
      _
    $region23: #{tpu_custom_call.1} parent=1 // pred_check_branch
      %1579 = sbr.rel (0) target = $region25
    $region24: #{tpu_custom_call.1} parent=1 // pred_region
      %1581 = dma.done [#allocation4], 128
    $region25: #{tpu_custom_call.1} parent=1 // pred_fallthru
      _
    %1582 = vsyncpa [#allocation3], 1
    %1583 = vsyncpa [#allocation6], 1
    %1584 = vsyncpa [#allocation4], 1

</llo_original>
